<compile_context>
chip_gen: v6e
topology: v6e:2x2x1
jax: 0.10.0
libtpu: 0.0.40
codegen_flags: <defaults>
</compile_context>

<pallas_src>
import numpy as np
import jax
import jax.numpy as jnp
from jax.experimental import pallas as pl
from jax.experimental.pallas import tpu as pltpu


# ----------------------------------------------------------------------------
# Pallas kernel: all coupling MLPs + scaling + Gaussian log-prob for one tile
# ----------------------------------------------------------------------------
def make_nice_kernel(coupling: int, hidden: int, has_hidden_slab: bool):
    n_hid = hidden - 1  # number of (mid -> mid) hidden Linear layers per coupling

    def kernel(*refs):
        # refs: const, x, scale_col, w_first, [w_hid], w_last, b_mid, b_last, out
        const_ref, x_ref, s_ref, wf_ref = refs[:4]
        if has_hidden_slab:
            wh_ref, wlast_ref, bm_ref, bl_ref, out_ref = refs[4:]
        else:
            wlast_ref, bm_ref, bl_ref, out_ref = refs[4:]
            wh_ref = None

        # One in-kernel transpose (XLU slot, otherwise idle) replaces the
        # wrapper-side gather+transpose HBM pass: x arrives as (TILE_B, D) in its
        # natural layout and becomes (D, TILE_B) so every matmul puts the batch
        # on the MXU lane axis and the final reduction is over sublanes.
        x_t = x_ref[...].T                                    # (D, TILE_B) f32

        for i in range(coupling):
            # First Linear: zero columns in w_first select the masked half x1,
            # so no strided even/odd slicing is needed inside the kernel.
            w0 = wf_ref[i]                                    # (mid, D) bf16
            h = jnp.dot(w0, x_t.astype(w0.dtype),
                        preferred_element_type=jnp.float32) + bm_ref[i * hidden]
            h = jnp.maximum(h, 0.0)                           # ReLU in f32 (VPU)

            for l in range(n_hid):
                wm = wh_ref[i * n_hid + l]                    # (mid, mid) bf16
                h = jnp.dot(wm, h.astype(wm.dtype),
                            preferred_element_type=jnp.float32) + bm_ref[i * hidden + 1 + l]
                h = jnp.maximum(h, 0.0)

            # Last Linear: zero rows in w_last / b_last scatter the additive
            # update into the other half x2, leaving x1 untouched exactly.
            wN = wlast_ref[i]                                 # (D, mid) bf16
            x_t = x_t + (jnp.dot(wN, h.astype(wN.dtype),
                                 preferred_element_type=jnp.float32) + bl_ref[i])

        # ---- Scaling layer (exp(s)+eps precomputed in the wrapper) ----
        z = x_t * s_ref[...]                                  # (D, TILE_B) * (D, 1)

        # ---- Gaussian log-prob: -0.5*sum(z^2) + const ----
        # const = sum(log(scale)) - log(256)*D - 0.5*D*log(2*pi)  (hoisted)
        ssq = jnp.sum(z * z, axis=0, keepdims=True)           # (1, TILE_B) sublane reduce
        out_ref[...] = (-0.5 * ssq + const_ref[0, 0]).astype(out_ref.dtype)

    return kernel


# ----------------------------------------------------------------------------
# Tile sizing & VMEM budget helpers
# ----------------------------------------------------------------------------
def _choose_tile_b(B, *, lane_mult=256, max_tile=2048):
    """Batch tile: multiple of 256 (fills v6e/v7x MXU lanes; v5e is full at 128),
    aimed at ~2 tiles so both v7x TensorCores get work for small batches."""
    target = -(-B // 2)                            # ceil(B / 2)
    t = -(-target // lane_mult) * lane_mult        # round up to 256
    return int(min(max(t, lane_mult), max_tile))


def _vmem_limit_bytes(tile_b, D, mid, coupling, hidden):
    """~2x a padded-shape estimate; no large floor/cap so surrounding XLA
    fusions keep their scoped VMEM (matters most on v7x's 64 MiB)."""
    lane = lambda n: -(-n // 128) * 128
    sub8 = lambda n: -(-n // 8) * 8
    sub16 = lambda n: -(-n // 16) * 16
    f32, bf16 = 4, 2
    x_tiles = 2 * sub8(tile_b) * lane(D) * f32                     # double-buffered input
    out_tiles = 2 * 8 * lane(tile_b) * f32                         # double-buffered output row
    params = (coupling * sub16(mid) * lane(D) * bf16               # w_first slab
              + coupling * max(hidden - 1, 0) * sub16(mid) * lane(mid) * bf16
              + coupling * sub16(D) * lane(mid) * bf16             # w_last slab
              + coupling * hidden * sub8(mid) * lane(1) * f32      # b_mid slab
              + coupling * sub8(D) * lane(1) * f32                 # b_last slab
              + sub8(D) * lane(1) * f32)                           # scale column
    params *= 2                                                    # pipeline buffering slack
    acts = (2 * sub8(D) + 4 * sub8(mid)) * lane(tile_b) * f32      # x_t, h, temps
    est = x_tiles + out_tiles + params + acts
    return int(2 * est + (2 << 20))


# ----------------------------------------------------------------------------
# Wrapper: parameter packing, hoisted constants, BlockSpecs / grid
# ----------------------------------------------------------------------------
def nice_forward_pallas(x, flat_params, scale, *, coupling, hidden, in_out_dim,
                        mid_dim, tile_b=None, param_dtype=jnp.bfloat16):
    """x: (B, D) float32.  flat_params: [W0, b0, W1, b1, ...] (PyTorch layout,
    W: (in, out), b: (1, out)) across all coupling layers.  scale: (1, D)."""
    B, D = x.shape
    assert D == in_out_dim and D % 2 == 0
    assert hidden >= 1
    mid = mid_dim
    n_lin = hidden + 1

    if tile_b is None:
        tile_b = _choose_tile_b(B)
    B_pad = -(-B // tile_b) * tile_b
    if B_pad != B:
        x = jnp.pad(x, ((0, B_pad - B), (0, 0)))   # padded rows discarded at the end
    num_tiles = B_pad // tile_b

    # ---- Fold the even/odd coupling masks into zero-padded first/last weights,
    #      and pack all parameters into a handful of slabs (few large DMAs). ----
    wf_l, wh_l, wN_l, bm_l, bN_l = [], [], [], [], []
    for i in range(coupling):
        m = i % 2
        for l in range(n_lin):
            W = flat_params[2 * (i * n_lin + l)].T            # (out, in)
            b = flat_params[2 * (i * n_lin + l) + 1].T        # (out, 1)
            if l == 0:
                # x1 = x[:, m::2]  ->  column 2p+m of the full-D weight is W[:, p]
                wf_l.append(jnp.zeros((mid, D), W.dtype).at[:, m::2].set(W))
                bm_l.append(b)
            elif l < n_lin - 1:
                wh_l.append(W)
                bm_l.append(b)
            else:
                # x2 = x[:, 1-m::2]  ->  row 2p+(1-m) of the full-D output is W[p, :]
                wN_l.append(jnp.zeros((D, mid), W.dtype).at[1 - m::2, :].set(W))
                bN_l.append(jnp.zeros((D, 1), b.dtype).at[1 - m::2, :].set(b))

    w_first = jnp.stack(wf_l).astype(param_dtype)             # (coupling, mid, D) bf16
    w_last = jnp.stack(wN_l).astype(param_dtype)              # (coupling, D, mid) bf16
    b_mid = jnp.stack(bm_l).astype(jnp.float32)               # (coupling*hidden, mid, 1) f32
    b_last = jnp.stack(bN_l).astype(jnp.float32)              # (coupling, D, 1) f32
    has_hidden_slab = hidden > 1
    if has_hidden_slab:
        w_hid = jnp.stack(wh_l).astype(param_dtype)           # (coupling*(hidden-1), mid, mid)

    # ---- Hoisted batch-invariant scaling / log-det / prior constants ----
    sc = jnp.exp(scale) + jnp.float32(1e-5)                   # (1, D)
    s_col = sc.reshape(D, 1).astype(jnp.float32)              # (D, 1), original feature order
    const = (jnp.sum(jnp.log(sc))
             - jnp.float32(np.log(256.0) * D)
             - jnp.float32(0.5 * np.log(2.0 * np.pi) * D))
    const = const.reshape(1, 1).astype(jnp.float32)           # SMEM scalar

    inputs = [const, x, s_col, w_first]
    in_specs = [
        pl.BlockSpec((1, 1), lambda i: (0, 0),
                     memory_space=pltpu.MemorySpace.SMEM),            # const
        pl.BlockSpec((tile_b, D), lambda i: (i, 0)),                  # x tile (natural layout)
        pl.BlockSpec((D, 1), lambda i: (0, 0)),                       # scale column
        pl.BlockSpec(w_first.shape, lambda i: (0, 0, 0)),             # resident slabs ...
    ]
    if has_hidden_slab:
        inputs.append(w_hid)
        in_specs.append(pl.BlockSpec(w_hid.shape, lambda i: (0, 0, 0)))
    inputs += [w_last, b_mid, b_last]
    in_specs += [pl.BlockSpec(w_last.shape, lambda i: (0, 0, 0)),
                 pl.BlockSpec(b_mid.shape, lambda i: (0, 0, 0)),
                 pl.BlockSpec(b_last.shape, lambda i: (0, 0, 0))]

    out_spec = pl.BlockSpec((1, tile_b), lambda i: (0, i))            # lane-dense output row

    vmem_limit = _vmem_limit_bytes(tile_b, D, mid, coupling, hidden)

    kernel = make_nice_kernel(coupling, hidden, has_hidden_slab)
    out = pl.pallas_call(
        kernel,
        out_shape=jax.ShapeDtypeStruct((1, B_pad), jnp.float32),
        grid=(num_tiles,),
        in_specs=in_specs,
        out_specs=out_spec,
        compiler_params=pltpu.CompilerParams(
            dimension_semantics=("parallel",),   # batch tiles split across TCs (v7x)
            vmem_limit_bytes=vmem_limit),
    )(*inputs)
    return out[0, :B]                            # (B,) log-likelihood per example


# ----------------------------------------------------------------------------
# Pure-JAX reference (mirrors the PyTorch code, including interleaving).
# Uses the same bf16 MXU operands / f32 accumulation as the kernel.
# ----------------------------------------------------------------------------
def nice_forward_reference(x, per_layer_params, scale, *, coupling, hidden,
                           in_out_dim, param_dtype=jnp.bfloat16):
    D = in_out_dim
    n_lin = hidden + 1
    for i in range(coupling):
        mask = i % 2
        x1 = x[:, mask::2]
        x2 = x[:, 1 - mask::2]
        h = x1
        for l in range(n_lin):
            W, b = per_layer_params[i][l]
            h = jnp.dot(h.astype(param_dtype), W.astype(param_dtype),
                        preferred_element_type=jnp.float32) + b
            if l < n_lin - 1:
                h = jax.nn.relu(h)
        x2 = x2 + h
        ordered = [x1, x2] if mask == 0 else [x2, x1]
        x = jnp.stack(ordered, axis=2).reshape(-1, D)
    sc = jnp.exp(scale) + 1e-5
    z = x * sc
    log_det_J = jnp.sum(jnp.log(sc)) - np.log(256.0) * D
    log_ll = jnp.sum(-0.5 * z * z - 0.5 * np.log(2.0 * np.pi), axis=1)
    return log_ll + log_det_J


# ----------------------------------------------------------------------------
# Deterministic parameter construction
# ----------------------------------------------------------------------------
def build_params(key, *, coupling, hidden, in_out_dim, mid_dim):
    D = in_out_dim
    half = D // 2
    n_lin = hidden + 1
    dims = [half] + [mid_dim] * hidden + [half]  # Linear in/out chain

    per_layer = []   # [[(W, b), ...] per coupling layer]
    flat = []        # [W, b, W, b, ...] flattened for the kernel wrapper
    for _ in range(coupling):
        layer = []
        for l in range(n_lin):
            key, kw, kb = jax.random.split(key, 3)
            fan_in = dims[l]
            W = jax.random.normal(kw, (dims[l], dims[l + 1]),
                                  dtype=jnp.float32) * (1.0 / np.sqrt(fan_in))
            b = jax.random.normal(kb, (1, dims[l + 1]),
                                  dtype=jnp.float32) * 0.01
            layer.append((W, b))
            flat.extend([W, b])
        per_layer.append(layer)

    # Scaling parameter (PyTorch inits to zeros; small random values exercise
    # the scaling / log-det path non-trivially).
    key, ks = jax.random.split(key)
    scale = jax.random.normal(ks, (1, D), dtype=jnp.float32) * 0.1
    return per_layer, flat, scale


# ----------------------------------------------------------------------------
if __name__ == "__main__":
    # Small shapes consistent with the module's forward (a minibatch of flat data).
    B = 1000         # batch -> tile_b=512, 2 grid tiles of 512 (one per v7x TC)
    D = 16           # in_out_dim
    MID = 32         # mid_dim
    HIDDEN = 2       # hidden layers
    COUPLING = 4     # coupling layers

    key = jax.random.PRNGKey(0)
    key, kx, kp = jax.random.split(key, 3)
    x = jax.random.uniform(kx, (B, D), dtype=jnp.float32)  # "image" data in [0,1)

    per_layer, flat, scale = build_params(
        kp, coupling=COUPLING, hidden=HIDDEN, in_out_dim=D, mid_dim=MID)

    out = nice_forward_pallas(x, flat, scale,
                              coupling=COUPLING, hidden=HIDDEN,
                              in_out_dim=D, mid_dim=MID)
    out = jax.block_until_ready(out)

    ref = nice_forward_reference(x, per_layer, scale,
                                 coupling=COUPLING, hidden=HIDDEN, in_out_dim=D)
    ref = jax.block_until_ready(ref)

    assert out.shape == (B,)
    # Kernel and reference use identical bf16 weights with f32 accumulation;
    # residual differences come from accumulation order / bf16 rounding-boundary
    # flips across the two matmul orientations, on values of magnitude ~1e2.
    np.testing.assert_allclose(np.asarray(out), np.asarray(ref),
                               rtol=2e-3, atol=2e-1)
    print("KERNEL_OK")
</pallas_src>

<mosaic_0001>
module attributes {stable_mosaic.version = 11 : i64} {
  func.func @kernel(%arg0: i32, %arg1: memref<1x1xf32, #tpu.memory_space<smem>>, %arg2: memref<512x16xf32, #tpu.memory_space<vmem>>, %arg3: memref<16x1xf32, #tpu.memory_space<vmem>>, %arg4: memref<4x32x16xbf16, #tpu.memory_space<vmem>>, %arg5: memref<4x32x32xbf16, #tpu.memory_space<vmem>>, %arg6: memref<4x16x32xbf16, #tpu.memory_space<vmem>>, %arg7: memref<8x32x1xf32, #tpu.memory_space<vmem>>, %arg8: memref<4x16x1xf32, #tpu.memory_space<vmem>>, %arg9: memref<1x512xf32, #tpu.memory_space<vmem>>) attributes {dimension_semantics = [#tpu.dimension_semantics<parallel>], iteration_bounds = array<i64: 2>, scalar_prefetch = 0 : i64, scratch_operands = 0 : i64, tpu.core_type = #tpu.core_type<tc>, window_params = [{transform_indices = @transform_0, window_bounds = array<i64: 1, 1>}, {transform_indices = @transform_1, window_bounds = array<i64: 512, 16>}, {pipeline_mode = #tpu.pipeline_mode<synchronous>, transform_indices = @transform_2, window_bounds = array<i64: 16, 1>}, {pipeline_mode = #tpu.pipeline_mode<synchronous>, transform_indices = @transform_3, window_bounds = array<i64: 4, 32, 16>}, {pipeline_mode = #tpu.pipeline_mode<synchronous>, transform_indices = @transform_4, window_bounds = array<i64: 4, 32, 32>}, {pipeline_mode = #tpu.pipeline_mode<synchronous>, transform_indices = @transform_5, window_bounds = array<i64: 4, 16, 32>}, {pipeline_mode = #tpu.pipeline_mode<synchronous>, transform_indices = @transform_6, window_bounds = array<i64: 8, 32, 1>}, {pipeline_mode = #tpu.pipeline_mode<synchronous>, transform_indices = @transform_7, window_bounds = array<i64: 4, 16, 1>}, {transform_indices = @transform_8, window_bounds = array<i64: 1, 512>}]} {
    %c0 = arith.constant 0 : index
    %c0_0 = arith.constant 0 : index
    %0 = vector.load %arg2[%c0, %c0_0] : memref<512x16xf32, #tpu.memory_space<vmem>>, vector<512x16xf32>
    %1 = tpu.transpose %0, [1, 0] : vector<512x16xf32> -> vector<16x512xf32>
    %c0_1 = arith.constant 0 : index
    %c0_2 = arith.constant 0 : index
    %c0_3 = arith.constant 0 : index
    %2 = vector.load %arg4[%c0_1, %c0_2, %c0_3] : memref<4x32x16xbf16, #tpu.memory_space<vmem>>, vector<1x32x16xbf16>
    %3 = vector.shape_cast %2 : vector<1x32x16xbf16> to vector<32x16xbf16>
    %4 = arith.truncf %1 : vector<16x512xf32> to vector<16x512xbf16>
    %cst = arith.constant dense<0.000000e+00> : vector<32x512xf32>
    %5 = tpu.matmul %3, %4, %cst {dimension_numbers = #tpu.dot_dimension_numbers<[1], [0], [0], [1], [0, 0, 1, 1], [], []>} : vector<32x16xbf16>, vector<16x512xbf16>, vector<32x512xf32> -> vector<32x512xf32>
    %c0_4 = arith.constant 0 : index
    %c0_5 = arith.constant 0 : index
    %c0_6 = arith.constant 0 : index
    %6 = vector.load %arg7[%c0_4, %c0_5, %c0_6] : memref<8x32x1xf32, #tpu.memory_space<vmem>>, vector<1x32x1xf32>
    %7 = vector.shape_cast %6 : vector<1x32x1xf32> to vector<32x1xf32>
    %8 = vector.broadcast %7 : vector<32x1xf32> to vector<32x512xf32>
    %9 = arith.addf %5, %8 : vector<32x512xf32>
    %cst_7 = arith.constant 0.000000e+00 : f32
    %10 = vector.broadcast %cst_7 : f32 to vector<32x512xf32>
    %11 = arith.maximumf %9, %10 : vector<32x512xf32>
    %c0_8 = arith.constant 0 : index
    %c0_9 = arith.constant 0 : index
    %c0_10 = arith.constant 0 : index
    %12 = vector.load %arg5[%c0_8, %c0_9, %c0_10] : memref<4x32x32xbf16, #tpu.memory_space<vmem>>, vector<1x32x32xbf16>
    %13 = vector.shape_cast %12 : vector<1x32x32xbf16> to vector<32x32xbf16>
    %14 = arith.truncf %11 : vector<32x512xf32> to vector<32x512xbf16>
    %cst_11 = arith.constant dense<0.000000e+00> : vector<32x512xf32>
    %15 = tpu.matmul %13, %14, %cst_11 {dimension_numbers = #tpu.dot_dimension_numbers<[1], [0], [0], [1], [0, 0, 1, 1], [], []>} : vector<32x32xbf16>, vector<32x512xbf16>, vector<32x512xf32> -> vector<32x512xf32>
    %c1 = arith.constant 1 : index
    %c0_12 = arith.constant 0 : index
    %c0_13 = arith.constant 0 : index
    %16 = vector.load %arg7[%c1, %c0_12, %c0_13] : memref<8x32x1xf32, #tpu.memory_space<vmem>>, vector<1x32x1xf32>
    %17 = vector.shape_cast %16 : vector<1x32x1xf32> to vector<32x1xf32>
    %18 = vector.broadcast %17 : vector<32x1xf32> to vector<32x512xf32>
    %19 = arith.addf %15, %18 : vector<32x512xf32>
    %cst_14 = arith.constant 0.000000e+00 : f32
    %20 = vector.broadcast %cst_14 : f32 to vector<32x512xf32>
    %21 = arith.maximumf %19, %20 : vector<32x512xf32>
    %c0_15 = arith.constant 0 : index
    %c0_16 = arith.constant 0 : index
    %c0_17 = arith.constant 0 : index
    %22 = vector.load %arg6[%c0_15, %c0_16, %c0_17] : memref<4x16x32xbf16, #tpu.memory_space<vmem>>, vector<1x16x32xbf16>
    %23 = vector.shape_cast %22 : vector<1x16x32xbf16> to vector<16x32xbf16>
    %24 = arith.truncf %21 : vector<32x512xf32> to vector<32x512xbf16>
    %cst_18 = arith.constant dense<0.000000e+00> : vector<16x512xf32>
    %25 = tpu.matmul %23, %24, %cst_18 {dimension_numbers = #tpu.dot_dimension_numbers<[1], [0], [0], [1], [0, 0, 1, 1], [], []>} : vector<16x32xbf16>, vector<32x512xbf16>, vector<16x512xf32> -> vector<16x512xf32>
    %c0_19 = arith.constant 0 : index
    %c0_20 = arith.constant 0 : index
    %c0_21 = arith.constant 0 : index
    %26 = vector.load %arg8[%c0_19, %c0_20, %c0_21] : memref<4x16x1xf32, #tpu.memory_space<vmem>>, vector<1x16x1xf32>
    %27 = vector.shape_cast %26 : vector<1x16x1xf32> to vector<16x1xf32>
    %28 = vector.broadcast %27 : vector<16x1xf32> to vector<16x512xf32>
    %29 = arith.addf %25, %28 : vector<16x512xf32>
    %30 = arith.addf %1, %29 : vector<16x512xf32>
    %c1_22 = arith.constant 1 : index
    %c0_23 = arith.constant 0 : index
    %c0_24 = arith.constant 0 : index
    %31 = vector.load %arg4[%c1_22, %c0_23, %c0_24] : memref<4x32x16xbf16, #tpu.memory_space<vmem>>, vector<1x32x16xbf16>
    %32 = vector.shape_cast %31 : vector<1x32x16xbf16> to vector<32x16xbf16>
    %33 = arith.truncf %30 : vector<16x512xf32> to vector<16x512xbf16>
    %cst_25 = arith.constant dense<0.000000e+00> : vector<32x512xf32>
    %34 = tpu.matmul %32, %33, %cst_25 {dimension_numbers = #tpu.dot_dimension_numbers<[1], [0], [0], [1], [0, 0, 1, 1], [], []>} : vector<32x16xbf16>, vector<16x512xbf16>, vector<32x512xf32> -> vector<32x512xf32>
    %c2 = arith.constant 2 : index
    %c0_26 = arith.constant 0 : index
    %c0_27 = arith.constant 0 : index
    %35 = vector.load %arg7[%c2, %c0_26, %c0_27] : memref<8x32x1xf32, #tpu.memory_space<vmem>>, vector<1x32x1xf32>
    %36 = vector.shape_cast %35 : vector<1x32x1xf32> to vector<32x1xf32>
    %37 = vector.broadcast %36 : vector<32x1xf32> to vector<32x512xf32>
    %38 = arith.addf %34, %37 : vector<32x512xf32>
    %cst_28 = arith.constant 0.000000e+00 : f32
    %39 = vector.broadcast %cst_28 : f32 to vector<32x512xf32>
    %40 = arith.maximumf %38, %39 : vector<32x512xf32>
    %c1_29 = arith.constant 1 : index
    %c0_30 = arith.constant 0 : index
    %c0_31 = arith.constant 0 : index
    %41 = vector.load %arg5[%c1_29, %c0_30, %c0_31] : memref<4x32x32xbf16, #tpu.memory_space<vmem>>, vector<1x32x32xbf16>
    %42 = vector.shape_cast %41 : vector<1x32x32xbf16> to vector<32x32xbf16>
    %43 = arith.truncf %40 : vector<32x512xf32> to vector<32x512xbf16>
    %cst_32 = arith.constant dense<0.000000e+00> : vector<32x512xf32>
    %44 = tpu.matmul %42, %43, %cst_32 {dimension_numbers = #tpu.dot_dimension_numbers<[1], [0], [0], [1], [0, 0, 1, 1], [], []>} : vector<32x32xbf16>, vector<32x512xbf16>, vector<32x512xf32> -> vector<32x512xf32>
    %c3 = arith.constant 3 : index
    %c0_33 = arith.constant 0 : index
    %c0_34 = arith.constant 0 : index
    %45 = vector.load %arg7[%c3, %c0_33, %c0_34] : memref<8x32x1xf32, #tpu.memory_space<vmem>>, vector<1x32x1xf32>
    %46 = vector.shape_cast %45 : vector<1x32x1xf32> to vector<32x1xf32>
    %47 = vector.broadcast %46 : vector<32x1xf32> to vector<32x512xf32>
    %48 = arith.addf %44, %47 : vector<32x512xf32>
    %cst_35 = arith.constant 0.000000e+00 : f32
    %49 = vector.broadcast %cst_35 : f32 to vector<32x512xf32>
    %50 = arith.maximumf %48, %49 : vector<32x512xf32>
    %c1_36 = arith.constant 1 : index
    %c0_37 = arith.constant 0 : index
    %c0_38 = arith.constant 0 : index
    %51 = vector.load %arg6[%c1_36, %c0_37, %c0_38] : memref<4x16x32xbf16, #tpu.memory_space<vmem>>, vector<1x16x32xbf16>
    %52 = vector.shape_cast %51 : vector<1x16x32xbf16> to vector<16x32xbf16>
    %53 = arith.truncf %50 : vector<32x512xf32> to vector<32x512xbf16>
    %cst_39 = arith.constant dense<0.000000e+00> : vector<16x512xf32>
    %54 = tpu.matmul %52, %53, %cst_39 {dimension_numbers = #tpu.dot_dimension_numbers<[1], [0], [0], [1], [0, 0, 1, 1], [], []>} : vector<16x32xbf16>, vector<32x512xbf16>, vector<16x512xf32> -> vector<16x512xf32>
    %c1_40 = arith.constant 1 : index
    %c0_41 = arith.constant 0 : index
    %c0_42 = arith.constant 0 : index
    %55 = vector.load %arg8[%c1_40, %c0_41, %c0_42] : memref<4x16x1xf32, #tpu.memory_space<vmem>>, vector<1x16x1xf32>
    %56 = vector.shape_cast %55 : vector<1x16x1xf32> to vector<16x1xf32>
    %57 = vector.broadcast %56 : vector<16x1xf32> to vector<16x512xf32>
    %58 = arith.addf %54, %57 : vector<16x512xf32>
    %59 = arith.addf %30, %58 : vector<16x512xf32>
    %c2_43 = arith.constant 2 : index
    %c0_44 = arith.constant 0 : index
    %c0_45 = arith.constant 0 : index
    %60 = vector.load %arg4[%c2_43, %c0_44, %c0_45] : memref<4x32x16xbf16, #tpu.memory_space<vmem>>, vector<1x32x16xbf16>
    %61 = vector.shape_cast %60 : vector<1x32x16xbf16> to vector<32x16xbf16>
    %62 = arith.truncf %59 : vector<16x512xf32> to vector<16x512xbf16>
    %cst_46 = arith.constant dense<0.000000e+00> : vector<32x512xf32>
    %63 = tpu.matmul %61, %62, %cst_46 {dimension_numbers = #tpu.dot_dimension_numbers<[1], [0], [0], [1], [0, 0, 1, 1], [], []>} : vector<32x16xbf16>, vector<16x512xbf16>, vector<32x512xf32> -> vector<32x512xf32>
    %c4 = arith.constant 4 : index
    %c0_47 = arith.constant 0 : index
    %c0_48 = arith.constant 0 : index
    %64 = vector.load %arg7[%c4, %c0_47, %c0_48] : memref<8x32x1xf32, #tpu.memory_space<vmem>>, vector<1x32x1xf32>
    %65 = vector.shape_cast %64 : vector<1x32x1xf32> to vector<32x1xf32>
    %66 = vector.broadcast %65 : vector<32x1xf32> to vector<32x512xf32>
    %67 = arith.addf %63, %66 : vector<32x512xf32>
    %cst_49 = arith.constant 0.000000e+00 : f32
    %68 = vector.broadcast %cst_49 : f32 to vector<32x512xf32>
    %69 = arith.maximumf %67, %68 : vector<32x512xf32>
    %c2_50 = arith.constant 2 : index
    %c0_51 = arith.constant 0 : index
    %c0_52 = arith.constant 0 : index
    %70 = vector.load %arg5[%c2_50, %c0_51, %c0_52] : memref<4x32x32xbf16, #tpu.memory_space<vmem>>, vector<1x32x32xbf16>
    %71 = vector.shape_cast %70 : vector<1x32x32xbf16> to vector<32x32xbf16>
    %72 = arith.truncf %69 : vector<32x512xf32> to vector<32x512xbf16>
    %cst_53 = arith.constant dense<0.000000e+00> : vector<32x512xf32>
    %73 = tpu.matmul %71, %72, %cst_53 {dimension_numbers = #tpu.dot_dimension_numbers<[1], [0], [0], [1], [0, 0, 1, 1], [], []>} : vector<32x32xbf16>, vector<32x512xbf16>, vector<32x512xf32> -> vector<32x512xf32>
    %c5 = arith.constant 5 : index
    %c0_54 = arith.constant 0 : index
    %c0_55 = arith.constant 0 : index
    %74 = vector.load %arg7[%c5, %c0_54, %c0_55] : memref<8x32x1xf32, #tpu.memory_space<vmem>>, vector<1x32x1xf32>
    %75 = vector.shape_cast %74 : vector<1x32x1xf32> to vector<32x1xf32>
    %76 = vector.broadcast %75 : vector<32x1xf32> to vector<32x512xf32>
    %77 = arith.addf %73, %76 : vector<32x512xf32>
    %cst_56 = arith.constant 0.000000e+00 : f32
    %78 = vector.broadcast %cst_56 : f32 to vector<32x512xf32>
    %79 = arith.maximumf %77, %78 : vector<32x512xf32>
    %c2_57 = arith.constant 2 : index
    %c0_58 = arith.constant 0 : index
    %c0_59 = arith.constant 0 : index
    %80 = vector.load %arg6[%c2_57, %c0_58, %c0_59] : memref<4x16x32xbf16, #tpu.memory_space<vmem>>, vector<1x16x32xbf16>
    %81 = vector.shape_cast %80 : vector<1x16x32xbf16> to vector<16x32xbf16>
    %82 = arith.truncf %79 : vector<32x512xf32> to vector<32x512xbf16>
    %cst_60 = arith.constant dense<0.000000e+00> : vector<16x512xf32>
    %83 = tpu.matmul %81, %82, %cst_60 {dimension_numbers = #tpu.dot_dimension_numbers<[1], [0], [0], [1], [0, 0, 1, 1], [], []>} : vector<16x32xbf16>, vector<32x512xbf16>, vector<16x512xf32> -> vector<16x512xf32>
    %c2_61 = arith.constant 2 : index
    %c0_62 = arith.constant 0 : index
    %c0_63 = arith.constant 0 : index
    %84 = vector.load %arg8[%c2_61, %c0_62, %c0_63] : memref<4x16x1xf32, #tpu.memory_space<vmem>>, vector<1x16x1xf32>
    %85 = vector.shape_cast %84 : vector<1x16x1xf32> to vector<16x1xf32>
    %86 = vector.broadcast %85 : vector<16x1xf32> to vector<16x512xf32>
    %87 = arith.addf %83, %86 : vector<16x512xf32>
    %88 = arith.addf %59, %87 : vector<16x512xf32>
    %c3_64 = arith.constant 3 : index
    %c0_65 = arith.constant 0 : index
    %c0_66 = arith.constant 0 : index
    %89 = vector.load %arg4[%c3_64, %c0_65, %c0_66] : memref<4x32x16xbf16, #tpu.memory_space<vmem>>, vector<1x32x16xbf16>
    %90 = vector.shape_cast %89 : vector<1x32x16xbf16> to vector<32x16xbf16>
    %91 = arith.truncf %88 : vector<16x512xf32> to vector<16x512xbf16>
    %cst_67 = arith.constant dense<0.000000e+00> : vector<32x512xf32>
    %92 = tpu.matmul %90, %91, %cst_67 {dimension_numbers = #tpu.dot_dimension_numbers<[1], [0], [0], [1], [0, 0, 1, 1], [], []>} : vector<32x16xbf16>, vector<16x512xbf16>, vector<32x512xf32> -> vector<32x512xf32>
    %c6 = arith.constant 6 : index
    %c0_68 = arith.constant 0 : index
    %c0_69 = arith.constant 0 : index
    %93 = vector.load %arg7[%c6, %c0_68, %c0_69] : memref<8x32x1xf32, #tpu.memory_space<vmem>>, vector<1x32x1xf32>
    %94 = vector.shape_cast %93 : vector<1x32x1xf32> to vector<32x1xf32>
    %95 = vector.broadcast %94 : vector<32x1xf32> to vector<32x512xf32>
    %96 = arith.addf %92, %95 : vector<32x512xf32>
    %cst_70 = arith.constant 0.000000e+00 : f32
    %97 = vector.broadcast %cst_70 : f32 to vector<32x512xf32>
    %98 = arith.maximumf %96, %97 : vector<32x512xf32>
    %c3_71 = arith.constant 3 : index
    %c0_72 = arith.constant 0 : index
    %c0_73 = arith.constant 0 : index
    %99 = vector.load %arg5[%c3_71, %c0_72, %c0_73] : memref<4x32x32xbf16, #tpu.memory_space<vmem>>, vector<1x32x32xbf16>
    %100 = vector.shape_cast %99 : vector<1x32x32xbf16> to vector<32x32xbf16>
    %101 = arith.truncf %98 : vector<32x512xf32> to vector<32x512xbf16>
    %cst_74 = arith.constant dense<0.000000e+00> : vector<32x512xf32>
    %102 = tpu.matmul %100, %101, %cst_74 {dimension_numbers = #tpu.dot_dimension_numbers<[1], [0], [0], [1], [0, 0, 1, 1], [], []>} : vector<32x32xbf16>, vector<32x512xbf16>, vector<32x512xf32> -> vector<32x512xf32>
    %c7 = arith.constant 7 : index
    %c0_75 = arith.constant 0 : index
    %c0_76 = arith.constant 0 : index
    %103 = vector.load %arg7[%c7, %c0_75, %c0_76] : memref<8x32x1xf32, #tpu.memory_space<vmem>>, vector<1x32x1xf32>
    %104 = vector.shape_cast %103 : vector<1x32x1xf32> to vector<32x1xf32>
    %105 = vector.broadcast %104 : vector<32x1xf32> to vector<32x512xf32>
    %106 = arith.addf %102, %105 : vector<32x512xf32>
    %cst_77 = arith.constant 0.000000e+00 : f32
    %107 = vector.broadcast %cst_77 : f32 to vector<32x512xf32>
    %108 = arith.maximumf %106, %107 : vector<32x512xf32>
    %c3_78 = arith.constant 3 : index
    %c0_79 = arith.constant 0 : index
    %c0_80 = arith.constant 0 : index
    %109 = vector.load %arg6[%c3_78, %c0_79, %c0_80] : memref<4x16x32xbf16, #tpu.memory_space<vmem>>, vector<1x16x32xbf16>
    %110 = vector.shape_cast %109 : vector<1x16x32xbf16> to vector<16x32xbf16>
    %111 = arith.truncf %108 : vector<32x512xf32> to vector<32x512xbf16>
    %cst_81 = arith.constant dense<0.000000e+00> : vector<16x512xf32>
    %112 = tpu.matmul %110, %111, %cst_81 {dimension_numbers = #tpu.dot_dimension_numbers<[1], [0], [0], [1], [0, 0, 1, 1], [], []>} : vector<16x32xbf16>, vector<32x512xbf16>, vector<16x512xf32> -> vector<16x512xf32>
    %c3_82 = arith.constant 3 : index
    %c0_83 = arith.constant 0 : index
    %c0_84 = arith.constant 0 : index
    %113 = vector.load %arg8[%c3_82, %c0_83, %c0_84] : memref<4x16x1xf32, #tpu.memory_space<vmem>>, vector<1x16x1xf32>
    %114 = vector.shape_cast %113 : vector<1x16x1xf32> to vector<16x1xf32>
    %115 = vector.broadcast %114 : vector<16x1xf32> to vector<16x512xf32>
    %116 = arith.addf %112, %115 : vector<16x512xf32>
    %117 = arith.addf %88, %116 : vector<16x512xf32>
    %c0_85 = arith.constant 0 : index
    %c0_86 = arith.constant 0 : index
    %118 = vector.load %arg3[%c0_85, %c0_86] : memref<16x1xf32, #tpu.memory_space<vmem>>, vector<16x1xf32>
    %119 = vector.broadcast %118 : vector<16x1xf32> to vector<16x512xf32>
    %120 = arith.mulf %117, %119 : vector<16x512xf32>
    %121 = arith.mulf %120, %120 : vector<16x512xf32>
    %cst_87 = arith.constant dense<0.000000e+00> : vector<512xf32>
    %122 = vector.multi_reduction <add>, %121, %cst_87 [0] : vector<16x512xf32> to vector<512xf32>
    %123 = vector.shape_cast %122 : vector<512xf32> to vector<1x512xf32>
    %cst_88 = arith.constant -5.000000e-01 : f32
    %124 = vector.broadcast %cst_88 : f32 to vector<1x512xf32>
    %125 = arith.mulf %124, %123 : vector<1x512xf32>
    %c0_89 = arith.constant 0 : index
    %c0_90 = arith.constant 0 : index
    %126 = memref.load %arg1[%c0_89, %c0_90] : memref<1x1xf32, #tpu.memory_space<smem>>
    %127 = vector.broadcast %126 : f32 to vector<1x512xf32>
    %128 = arith.addf %125, %127 : vector<1x512xf32>
    %c0_91 = arith.constant 0 : index
    %c0_92 = arith.constant 0 : index
    %129 = vector.load %arg9[%c0_91, %c0_92] : memref<1x512xf32, #tpu.memory_space<vmem>>, vector<1x512xf32>
    tpu.vector_store %arg9[%c0_91, %c0_92], %128 {strides = array<i32>} : memref<1x512xf32, #tpu.memory_space<vmem>>, vector<1x512xf32>,
    return
  }
  func.func @transform_0(%arg0: i32) -> (i32, i32) {
    %c0_i32 = arith.constant 0 : i32
    %c0_i32_0 = arith.constant 0 : i32
    %c0_i32_1 = arith.constant 0 : i32
    return %c0_i32, %c0_i32_0 : i32, i32
  }
  func.func @transform_1(%arg0: i32) -> (i32, i32) {
    %c0_i32 = arith.constant 0 : i32
    %c0_i32_0 = arith.constant 0 : i32
    return %arg0, %c0_i32 : i32, i32
  }
  func.func @transform_2(%arg0: i32) -> (i32, i32) {
    %c0_i32 = arith.constant 0 : i32
    %c0_i32_0 = arith.constant 0 : i32
    %c0_i32_1 = arith.constant 0 : i32
    return %c0_i32, %c0_i32_0 : i32, i32
  }
  func.func @transform_3(%arg0: i32) -> (i32, i32, i32) {
    %c0_i32 = arith.constant 0 : i32
    %c0_i32_0 = arith.constant 0 : i32
    %c0_i32_1 = arith.constant 0 : i32
    %c0_i32_2 = arith.constant 0 : i32
    return %c0_i32, %c0_i32_0, %c0_i32_1 : i32, i32, i32
  }
  func.func @transform_4(%arg0: i32) -> (i32, i32, i32) {
    %c0_i32 = arith.constant 0 : i32
    %c0_i32_0 = arith.constant 0 : i32
    %c0_i32_1 = arith.constant 0 : i32
    %c0_i32_2 = arith.constant 0 : i32
    return %c0_i32, %c0_i32_0, %c0_i32_1 : i32, i32, i32
  }
  func.func @transform_5(%arg0: i32) -> (i32, i32, i32) {
    %c0_i32 = arith.constant 0 : i32
    %c0_i32_0 = arith.constant 0 : i32
    %c0_i32_1 = arith.constant 0 : i32
    %c0_i32_2 = arith.constant 0 : i32
    return %c0_i32, %c0_i32_0, %c0_i32_1 : i32, i32, i32
  }
  func.func @transform_6(%arg0: i32) -> (i32, i32, i32) {
    %c0_i32 = arith.constant 0 : i32
    %c0_i32_0 = arith.constant 0 : i32
    %c0_i32_1 = arith.constant 0 : i32
    %c0_i32_2 = arith.constant 0 : i32
    return %c0_i32, %c0_i32_0, %c0_i32_1 : i32, i32, i32
  }
  func.func @transform_7(%arg0: i32) -> (i32, i32, i32) {
    %c0_i32 = arith.constant 0 : i32
    %c0_i32_0 = arith.constant 0 : i32
    %c0_i32_1 = arith.constant 0 : i32
    %c0_i32_2 = arith.constant 0 : i32
    return %c0_i32, %c0_i32_0, %c0_i32_1 : i32, i32, i32
  }
  func.func @transform_8(%arg0: i32) -> (i32, i32) {
    %c0_i32 = arith.constant 0 : i32
    %c0_i32_0 = arith.constant 0 : i32
    return %c0_i32, %arg0 : i32, i32
  }
}

</mosaic_0001>

<llo_original>
// kernel: tpu_custom_call.1
$region0: #{tpu_custom_call.1}
  #allocation0 [shape = 'u32[]', space=smem, size = 0x4, offset = 0x4, fixed_abs, tag = 'smem constant byte address 0x4 - core index']
  #allocation1 [shape = 'u32[144,128]{1,0:T(1,128)}', space=vmem, size = 0x12000, scoped, tag = 'internal scratch']
  #allocation2 [shape = 'f32[1,1]{1,0:T(1,128)S(6)}', space=smem, size = 0x200, scoped, tag = 'scoped memory for tpu_custom_call.1']
  %s0 = inlined_call_operand.<no memory space> [shape: f32[1,1], index: 0, kind: input, shape index: {}]
  %s1 = inlined_call_operand.vmem [shape: f32[1024,16], index: 1, kind: input, shape index: {}]
  %s2 = inlined_call_operand.vmem [shape: f32[16,1], index: 2, kind: input, shape index: {}]
  %s3 = inlined_call_operand.vmem [shape: bf16[4,32,16], index: 3, kind: input, shape index: {}]
  %s4 = inlined_call_operand.vmem [shape: bf16[4,32,32], index: 4, kind: input, shape index: {}]
  %s5 = inlined_call_operand.vmem [shape: bf16[4,16,32], index: 5, kind: input, shape index: {}]
  %s6 = inlined_call_operand.vmem [shape: f32[8,32,1], index: 6, kind: input, shape index: {}]
  %s7 = inlined_call_operand.vmem [shape: f32[4,16,1], index: 7, kind: input, shape index: {}]
  %s8 = inlined_call_operand.hbm [shape: f32[1,1024], index: 8, kind: output, shape index: {}]
  %s9 = sld [smem:[#allocation0]]
  $region65: #{tpu_custom_call.1} parent=0
    _
  %s11 = ssub.s32 1, %s9
  %s12 = scalar_select 0, %s11, %s9
  %13 = sst [smem:[#allocation2]] %s0
  $region1: #{tpu_custom_call.1} parent=0
    #allocation3 [shape = 'u8[4096]{0}', space=vmem, size = 0x1000, scoped, tag = 'output window, operand 0']
    #allocation4 [shape = 's32[2]{0}', space=sflag, size = 0x8, scoped, tag = 'scoped memory for tpu_custom_call.1']
    %14 = vsyncpa [#allocation4], 0
    %s15 = scalar_lea.sflag [#allocation4], 1
    %16 = vsyncpa %s15, 0
    loop: start=0, step=1, limit=4
    $region2: #{tpu_custom_call.1} parent=1 // loop_pre_header
      _
    $region3: #{tpu_custom_call.1} parent=1 // loop_header
      %s18 = sphi 0, %s22
      %p19 = scmp.ge.s32.totalorder %s18, 4
      %s26 = sphi 0, %s26
      %s28 = sphi 0, %s26
      %s29 = sphi 0, %s28
      %s43 = sphi 0, %s29
      %s49 = sphi 0, %s51
      %s52 = sphi 0, %s49
      %s53 = sphi 0, %s52
      %s69 = sphi 0, %s53
      %s73 = sphi 0, %s73
      %s75 = sphi 0, %s73
      %s76 = sphi 0, %s75
      %s90 = sphi 0, %s76
      %s94 = sphi 0, %s94
      %s96 = sphi 0, %s94
      %s97 = sphi 0, %s96
      %s111 = sphi 0, %s97
      %s115 = sphi 0, %s115
      %s117 = sphi 0, %s115
      %s118 = sphi 0, %s117
      %s132 = sphi 0, %s118
      %s136 = sphi 0, %s136
      %s138 = sphi 0, %s136
      %s139 = sphi 0, %s138
      %s153 = sphi 0, %s139
      %s157 = sphi 0, %s157
      %s159 = sphi 0, %s157
      %s160 = sphi 0, %s159
      %s174 = sphi 0, %s160
      %s178 = sphi 0, %s178
      %s180 = sphi 0, %s178
      %s181 = sphi 0, %s180
      %s195 = sphi 0, %s181
      %s201 = sphi 0, %s203
      %s204 = sphi 0, %s201
      %s205 = sphi 0, %s204
      %s221 = sphi 0, %s205
    $region4: #{tpu_custom_call.1} parent=1 // loop_header_branch
      %21 = sbr.rel (%p19) target = $region8
    $region5: #{tpu_custom_call.1} parent=1 // loop_body
      %s23 = ssub.s32 %s18, 1
      %s24 = ssub.s32 %s18, 2
      %s25 = sadd.s32 %s18, 1
      %s27 = sadd.s32 %s26, 1
      %p30 = scmp.eq.s32.totalorder %s18, 1
      %p31 = scmp.ne.s32.totalorder %s26, %s28
      %p32 = scmp.eq.s32.totalorder %s18, 0
      %p33 = por %p31, %p32
      %p34 = scmp.ne.s32.totalorder %s26, %s28
      %p35 = scmp.eq.s32.totalorder %s23, 1
      %p36 = por %p34, %p35
      %p37 = scmp.ne.s32.totalorder %s28, %s29
      %p38 = scmp.eq.s32.totalorder %s23, 0
      %p39 = por %p37, %p38
      %p40 = scmp.ne.s32.totalorder %s28, %s29
      %p41 = scmp.eq.s32.totalorder %s24, 1
      %p42 = por %p40, %p41
      %p44 = scmp.ne.s32.totalorder %s29, %s43
      %p45 = scmp.eq.s32.totalorder %s24, 0
      %p46 = por %p44, %p45
      %s47 = ssub.s32 %s18, %s25
      %p48 = scmp.eq.s32.totalorder %s47, 0
      %s50 = sadd.s32 %s49, 1
      %s51 = scalar_select %p48, %s49, %s50
      %p54 = pneg %p48
      %p55 = scmp.eq.s32.totalorder %s18, 1
      %p56 = por %p54, %p55
      %p57 = scmp.ne.s32.totalorder %s49, %s52
      %p58 = scmp.eq.s32.totalorder %s18, 0
      %p59 = por %p57, %p58
      %p60 = scmp.ne.s32.totalorder %s49, %s52
      %p61 = scmp.eq.s32.totalorder %s23, 1
      %p62 = por %p60, %p61
      %p63 = scmp.ne.s32.totalorder %s52, %s53
      %p64 = scmp.eq.s32.totalorder %s23, 0
      %p65 = por %p63, %p64
      %p66 = scmp.ne.s32.totalorder %s52, %s53
      %p67 = scmp.eq.s32.totalorder %s24, 1
      %p68 = por %p66, %p67
      %p70 = scmp.ne.s32.totalorder %s53, %s69
      %p71 = scmp.eq.s32.totalorder %s24, 0
      %p72 = por %p70, %p71
      %s74 = sadd.s32 %s73, 1
      %p77 = scmp.eq.s32.totalorder %s18, 1
      %p78 = scmp.ne.s32.totalorder %s73, %s75
      %p79 = scmp.eq.s32.totalorder %s18, 0
      %p80 = por %p78, %p79
      %p81 = scmp.ne.s32.totalorder %s73, %s75
      %p82 = scmp.eq.s32.totalorder %s23, 1
      %p83 = por %p81, %p82
      %p84 = scmp.ne.s32.totalorder %s75, %s76
      %p85 = scmp.eq.s32.totalorder %s23, 0
      %p86 = por %p84, %p85
      %p87 = scmp.ne.s32.totalorder %s75, %s76
      %p88 = scmp.eq.s32.totalorder %s24, 1
      %p89 = por %p87, %p88
      %p91 = scmp.ne.s32.totalorder %s76, %s90
      %p92 = scmp.eq.s32.totalorder %s24, 0
      %p93 = por %p91, %p92
      %s95 = sadd.s32 %s94, 1
      %p98 = scmp.eq.s32.totalorder %s18, 1
      %p99 = scmp.ne.s32.totalorder %s94, %s96
      %p100 = scmp.eq.s32.totalorder %s18, 0
      %p101 = por %p99, %p100
      %p102 = scmp.ne.s32.totalorder %s94, %s96
      %p103 = scmp.eq.s32.totalorder %s23, 1
      %p104 = por %p102, %p103
      %p105 = scmp.ne.s32.totalorder %s96, %s97
      %p106 = scmp.eq.s32.totalorder %s23, 0
      %p107 = por %p105, %p106
      %p108 = scmp.ne.s32.totalorder %s96, %s97
      %p109 = scmp.eq.s32.totalorder %s24, 1
      %p110 = por %p108, %p109
      %p112 = scmp.ne.s32.totalorder %s97, %s111
      %p113 = scmp.eq.s32.totalorder %s24, 0
      %p114 = por %p112, %p113
      %s116 = sadd.s32 %s115, 1
      %p119 = scmp.eq.s32.totalorder %s18, 1
      %p120 = scmp.ne.s32.totalorder %s115, %s117
      %p121 = scmp.eq.s32.totalorder %s18, 0
      %p122 = por %p120, %p121
      %p123 = scmp.ne.s32.totalorder %s115, %s117
      %p124 = scmp.eq.s32.totalorder %s23, 1
      %p125 = por %p123, %p124
      %p126 = scmp.ne.s32.totalorder %s117, %s118
      %p127 = scmp.eq.s32.totalorder %s23, 0
      %p128 = por %p126, %p127
      %p129 = scmp.ne.s32.totalorder %s117, %s118
      %p130 = scmp.eq.s32.totalorder %s24, 1
      %p131 = por %p129, %p130
      %p133 = scmp.ne.s32.totalorder %s118, %s132
      %p134 = scmp.eq.s32.totalorder %s24, 0
      %p135 = por %p133, %p134
      %s137 = sadd.s32 %s136, 1
      %p140 = scmp.eq.s32.totalorder %s18, 1
      %p141 = scmp.ne.s32.totalorder %s136, %s138
      %p142 = scmp.eq.s32.totalorder %s18, 0
      %p143 = por %p141, %p142
      %p144 = scmp.ne.s32.totalorder %s136, %s138
      %p145 = scmp.eq.s32.totalorder %s23, 1
      %p146 = por %p144, %p145
      %p147 = scmp.ne.s32.totalorder %s138, %s139
      %p148 = scmp.eq.s32.totalorder %s23, 0
      %p149 = por %p147, %p148
      %p150 = scmp.ne.s32.totalorder %s138, %s139
      %p151 = scmp.eq.s32.totalorder %s24, 1
      %p152 = por %p150, %p151
      %p154 = scmp.ne.s32.totalorder %s139, %s153
      %p155 = scmp.eq.s32.totalorder %s24, 0
      %p156 = por %p154, %p155
      %s158 = sadd.s32 %s157, 1
      %p161 = scmp.eq.s32.totalorder %s18, 1
      %p162 = scmp.ne.s32.totalorder %s157, %s159
      %p163 = scmp.eq.s32.totalorder %s18, 0
      %p164 = por %p162, %p163
      %p165 = scmp.ne.s32.totalorder %s157, %s159
      %p166 = scmp.eq.s32.totalorder %s23, 1
      %p167 = por %p165, %p166
      %p168 = scmp.ne.s32.totalorder %s159, %s160
      %p169 = scmp.eq.s32.totalorder %s23, 0
      %p170 = por %p168, %p169
      %p171 = scmp.ne.s32.totalorder %s159, %s160
      %p172 = scmp.eq.s32.totalorder %s24, 1
      %p173 = por %p171, %p172
      %p175 = scmp.ne.s32.totalorder %s160, %s174
      %p176 = scmp.eq.s32.totalorder %s24, 0
      %p177 = por %p175, %p176
      %s179 = sadd.s32 %s178, 1
      %p182 = scmp.eq.s32.totalorder %s18, 1
      %p183 = scmp.ne.s32.totalorder %s178, %s180
      %p184 = scmp.eq.s32.totalorder %s18, 0
      %p185 = por %p183, %p184
      %p186 = scmp.ne.s32.totalorder %s178, %s180
      %p187 = scmp.eq.s32.totalorder %s23, 1
      %p188 = por %p186, %p187
      %p189 = scmp.ne.s32.totalorder %s180, %s181
      %p190 = scmp.eq.s32.totalorder %s23, 0
      %p191 = por %p189, %p190
      %p192 = scmp.ne.s32.totalorder %s180, %s181
      %p193 = scmp.eq.s32.totalorder %s24, 1
      %p194 = por %p192, %p193
      %p196 = scmp.ne.s32.totalorder %s181, %s195
      %p197 = scmp.eq.s32.totalorder %s24, 0
      %p198 = por %p196, %p197
      %s199 = ssub.s32 %s18, %s25
      %p200 = scmp.eq.s32.totalorder %s199, 0
      %s202 = sadd.s32 %s201, 1
      %s203 = scalar_select %p200, %s201, %s202
      %p206 = pneg %p200
      %p207 = scmp.eq.s32.totalorder %s18, 1
      %p208 = por %p206, %p207
      %p209 = scmp.ne.s32.totalorder %s201, %s204
      %p210 = scmp.eq.s32.totalorder %s18, 0
      %p211 = por %p209, %p210
      %p212 = scmp.ne.s32.totalorder %s201, %s204
      %p213 = scmp.eq.s32.totalorder %s23, 1
      %p214 = por %p212, %p213
      %p215 = scmp.ne.s32.totalorder %s204, %s205
      %p216 = scmp.eq.s32.totalorder %s23, 0
      %p217 = por %p215, %p216
      %p218 = scmp.ne.s32.totalorder %s204, %s205
      %p219 = scmp.eq.s32.totalorder %s24, 1
      %p220 = por %p218, %p219
      %p222 = scmp.ne.s32.totalorder %s205, %s221
      %p223 = scmp.eq.s32.totalorder %s24, 0
      %p224 = por %p222, %p223
      %p225 = scmp.le.s32.totalorder 1, %s18
      %p226 = scmp.lt.s32.totalorder %s18, 3
      %p227 = pnand %p225, %p226
      %p228 = pneg %p227
      // Predicated region
      $region9: #{tpu_custom_call.1} parent=5 // pred_check
        _
      $region10: #{tpu_custom_call.1} parent=5 // pred_check_branch
        %230 = sbr.rel (%p227) target = $region12
      $region11: #{tpu_custom_call.1} parent=5 // pred_region
        %s231 = ssub.s32 %s18, 1
        // Predicated region
        $region13: #{tpu_custom_call.1} parent=11 // pred_check
          %p232 = pneg %p39
        $region14: #{tpu_custom_call.1} parent=11 // pred_check_branch
          %234 = sbr.rel (%p232) target = $region16
        $region15: #{tpu_custom_call.1} parent=11 // pred_region
          _
        $region16: #{tpu_custom_call.1} parent=11 // pred_fallthru
          _
        // Predicated region
        $region17: #{tpu_custom_call.1} parent=11 // pred_check
          %p235 = pneg %p86
        $region18: #{tpu_custom_call.1} parent=11 // pred_check_branch
          %237 = sbr.rel (%p235) target = $region20
        $region19: #{tpu_custom_call.1} parent=11 // pred_region
          _
        $region20: #{tpu_custom_call.1} parent=11 // pred_fallthru
          _
        // Predicated region
        $region21: #{tpu_custom_call.1} parent=11 // pred_check
          %p238 = pneg %p107
        $region22: #{tpu_custom_call.1} parent=11 // pred_check_branch
          %240 = sbr.rel (%p238) target = $region24
        $region23: #{tpu_custom_call.1} parent=11 // pred_region
          _
        $region24: #{tpu_custom_call.1} parent=11 // pred_fallthru
          _
        // Predicated region
        $region25: #{tpu_custom_call.1} parent=11 // pred_check
          %p241 = pneg %p128
        $region26: #{tpu_custom_call.1} parent=11 // pred_check_branch
          %243 = sbr.rel (%p241) target = $region28
        $region27: #{tpu_custom_call.1} parent=11 // pred_region
          _
        $region28: #{tpu_custom_call.1} parent=11 // pred_fallthru
          _
        // Predicated region
        $region29: #{tpu_custom_call.1} parent=11 // pred_check
          %p244 = pneg %p149
        $region30: #{tpu_custom_call.1} parent=11 // pred_check_branch
          %246 = sbr.rel (%p244) target = $region32
        $region31: #{tpu_custom_call.1} parent=11 // pred_region
          _
        $region32: #{tpu_custom_call.1} parent=11 // pred_fallthru
          _
        // Predicated region
        $region33: #{tpu_custom_call.1} parent=11 // pred_check
          %p247 = pneg %p170
        $region34: #{tpu_custom_call.1} parent=11 // pred_check_branch
          %249 = sbr.rel (%p247) target = $region36
        $region35: #{tpu_custom_call.1} parent=11 // pred_region
          _
        $region36: #{tpu_custom_call.1} parent=11 // pred_fallthru
          _
        // Predicated region
        $region37: #{tpu_custom_call.1} parent=11 // pred_check
          %p250 = pneg %p191
        $region38: #{tpu_custom_call.1} parent=11 // pred_check_branch
          %252 = sbr.rel (%p250) target = $region40
        $region39: #{tpu_custom_call.1} parent=11 // pred_region
          _
        $region40: #{tpu_custom_call.1} parent=11 // pred_fallthru
          _
      $region12: #{tpu_custom_call.1} parent=5 // pred_fallthru
        _
      %p253 = scmp.lt.s32.totalorder %s18, 2
      // Predicated region
      $region41: #{tpu_custom_call.1} parent=5 // pred_check
        %p254 = pneg %p253
      $region42: #{tpu_custom_call.1} parent=5 // pred_check_branch
        %256 = sbr.rel (%p254) target = $region44
      $region43: #{tpu_custom_call.1} parent=5 // pred_region
        // Predicated region
        $region45: #{tpu_custom_call.1} parent=43 // pred_check
          %p257 = pneg %p59
        $region46: #{tpu_custom_call.1} parent=43 // pred_check_branch
          %259 = sbr.rel (%p257) target = $region48
        $region47: #{tpu_custom_call.1} parent=43 // pred_region
          %s260 = smul.u32 64, %s18
          %p261 = scmp.lt.s32.totalorder %s260, 127
          %s262 = scalar_select %p261, %s260, 127
          %s263 = smul.addr %s262, 8
          %s264 = scalar_lea.vmem %s1, %s263
          %s265 = smul.u32 64, %s18
        $region48: #{tpu_custom_call.1} parent=43 // pred_fallthru
          _
      $region44: #{tpu_custom_call.1} parent=5 // pred_fallthru
        _
      %p266 = scmp.le.s32.totalorder 1, %s18
      %p267 = scmp.lt.s32.totalorder %s18, 3
      %p268 = pnand %p266, %p267
      %p269 = pneg %p268
      // Predicated region
      $region49: #{tpu_custom_call.1} parent=5 // pred_check
        _
      $region50: #{tpu_custom_call.1} parent=5 // pred_check_branch
        %271 = sbr.rel (%p268) target = $region52
      $region51: #{tpu_custom_call.1} parent=5 // pred_region
        %s272 = ssub.s32 %s18, 1
        %p273 = pneg %p39
        %p274 = pneg %p36
        %s275 = smul.u32 64, %s23
        %p276 = scmp.lt.s32.totalorder %s275, 127
        %s277 = scalar_select %p276, %s275, 127
        %s278 = smul.addr %s277, 8
        %s279 = scalar_lea.vmem %s1, %s278
        %p280 = pneg %p65
        %p281 = pneg %p62
        %p282 = pneg %p86
        %p283 = pneg %p83
        %p284 = pneg %p107
        %p285 = pneg %p104
        %p286 = pneg %p128
        %p287 = pneg %p125
        %p288 = pneg %p149
        %p289 = pneg %p146
        %p290 = pneg %p170
        %p291 = pneg %p167
        %p292 = pneg %p191
        %p293 = pneg %p188
        %p294 = pneg %p217
        %p295 = pneg %p214
        %s296 = sand.u32 %s204, 1
        %s297 = scalar_lea.sflag [#allocation4], %s296
        %s298 = sand.u32 %s204, 1
        %s299 = smul.addr %s298, 4
        %s300 = scalar_lea.vmem [#allocation3], %s299
        %s301 = smul.u32 64, %s23
        %p302 = scmp.lt.s32.totalorder %s301, 127
        %s303 = scalar_select %p302, %s301, 127
        %s304 = smul.addr %s303, 8
        %s305 = scalar_lea.vmem %s1, %s304
        %s306 = smul.u32 64, %s23
        %s307 = smul.u32 4, %s23
        %v309 = vld [vmem:[%s305] sm:$0xff]
        %v310 = vld [vmem:[%s305 + $0x8] sm:$0xff]
        %v311 = vld [vmem:[%s305 + $0x10] sm:$0xff]
        %v312 = vld [vmem:[%s305 + $0x18] sm:$0xff]
        %v313 = vld [vmem:[%s305 + $0x20] sm:$0xff]
        %v314 = vld [vmem:[%s305 + $0x28] sm:$0xff]
        %v315 = vld [vmem:[%s305 + $0x30] sm:$0xff]
        %v316 = vld [vmem:[%s305 + $0x38] sm:$0xff]
        %v317 = vld [vmem:[%s305 + $0x40] sm:$0xff]
        %v318 = vld [vmem:[%s305 + $0x48] sm:$0xff]
        %v319 = vld [vmem:[%s305 + $0x50] sm:$0xff]
        %v320 = vld [vmem:[%s305 + $0x58] sm:$0xff]
        %v321 = vld [vmem:[%s305 + $0x60] sm:$0xff]
        %v322 = vld [vmem:[%s305 + $0x68] sm:$0xff]
        %v323 = vld [vmem:[%s305 + $0x70] sm:$0xff]
        %v324 = vld [vmem:[%s305 + $0x78] sm:$0xff]
        %v325 = vld [vmem:[%s305 + $0x80] sm:$0xff]
        %v326 = vld [vmem:[%s305 + $0x88] sm:$0xff]
        %v327 = vld [vmem:[%s305 + $0x90] sm:$0xff]
        %v328 = vld [vmem:[%s305 + $0x98] sm:$0xff]
        %v329 = vld [vmem:[%s305 + $0xa0] sm:$0xff]
        %v330 = vld [vmem:[%s305 + $0xa8] sm:$0xff]
        %v331 = vld [vmem:[%s305 + $0xb0] sm:$0xff]
        %v332 = vld [vmem:[%s305 + $0xb8] sm:$0xff]
        %v333 = vld [vmem:[%s305 + $0xc0] sm:$0xff]
        %v334 = vld [vmem:[%s305 + $0xc8] sm:$0xff]
        %v335 = vld [vmem:[%s305 + $0xd0] sm:$0xff]
        %v336 = vld [vmem:[%s305 + $0xd8] sm:$0xff]
        %v337 = vld [vmem:[%s305 + $0xe0] sm:$0xff]
        %v338 = vld [vmem:[%s305 + $0xe8] sm:$0xff]
        %v339 = vld [vmem:[%s305 + $0xf0] sm:$0xff]
        %v340 = vld [vmem:[%s305 + $0xf8] sm:$0xff]
        %v341 = vld [vmem:[%s305 + $0x100] sm:$0xff]
        %v342 = vld [vmem:[%s305 + $0x108] sm:$0xff]
        %v343 = vld [vmem:[%s305 + $0x110] sm:$0xff]
        %v344 = vld [vmem:[%s305 + $0x118] sm:$0xff]
        %v345 = vld [vmem:[%s305 + $0x120] sm:$0xff]
        %v346 = vld [vmem:[%s305 + $0x128] sm:$0xff]
        %v347 = vld [vmem:[%s305 + $0x130] sm:$0xff]
        %v348 = vld [vmem:[%s305 + $0x138] sm:$0xff]
        %v349 = vld [vmem:[%s305 + $0x140] sm:$0xff]
        %v350 = vld [vmem:[%s305 + $0x148] sm:$0xff]
        %v351 = vld [vmem:[%s305 + $0x150] sm:$0xff]
        %v352 = vld [vmem:[%s305 + $0x158] sm:$0xff]
        %v353 = vld [vmem:[%s305 + $0x160] sm:$0xff]
        %v354 = vld [vmem:[%s305 + $0x168] sm:$0xff]
        %v355 = vld [vmem:[%s305 + $0x170] sm:$0xff]
        %v356 = vld [vmem:[%s305 + $0x178] sm:$0xff]
        %v357 = vld [vmem:[%s305 + $0x180] sm:$0xff]
        %v358 = vld [vmem:[%s305 + $0x188] sm:$0xff]
        %v359 = vld [vmem:[%s305 + $0x190] sm:$0xff]
        %v360 = vld [vmem:[%s305 + $0x198] sm:$0xff]
        %v361 = vld [vmem:[%s305 + $0x1a0] sm:$0xff]
        %v362 = vld [vmem:[%s305 + $0x1a8] sm:$0xff]
        %v363 = vld [vmem:[%s305 + $0x1b0] sm:$0xff]
        %v364 = vld [vmem:[%s305 + $0x1b8] sm:$0xff]
        %v365 = vld [vmem:[%s305 + $0x1c0] sm:$0xff]
        %v366 = vld [vmem:[%s305 + $0x1c8] sm:$0xff]
        %v367 = vld [vmem:[%s305 + $0x1d0] sm:$0xff]
        %v368 = vld [vmem:[%s305 + $0x1d8] sm:$0xff]
        %v369 = vld [vmem:[%s305 + $0x1e0] sm:$0xff]
        %v370 = vld [vmem:[%s305 + $0x1e8] sm:$0xff]
        %v371 = vld [vmem:[%s305 + $0x1f0] sm:$0xff]
        %v372 = vld [vmem:[%s305 + $0x1f8] sm:$0xff]
        %373 = vxpose.xlu0.b32.start [1/16] %v309, 128
        %374 = vxpose.xlu0.b32.cont [2/16] %v310, 128
        %375 = vxpose.xlu0.b32.cont [3/16] %v311, 128
        %376 = vxpose.xlu0.b32.cont [4/16] %v312, 128
        %377 = vxpose.xlu0.b32.cont [5/16] %v313, 128
        %378 = vxpose.xlu0.b32.cont [6/16] %v314, 128
        %379 = vxpose.xlu0.b32.cont [7/16] %v315, 128
        %380 = vxpose.xlu0.b32.cont [8/16] %v316, 128
        %381 = vxpose.xlu0.b32.cont [9/16] %v317, 128
        %382 = vxpose.xlu0.b32.cont [10/16] %v318, 128
        %383 = vxpose.xlu0.b32.cont [11/16] %v319, 128
        %384 = vxpose.xlu0.b32.cont [12/16] %v320, 128
        %385 = vxpose.xlu0.b32.cont [13/16] %v321, 128
        %386 = vxpose.xlu0.b32.cont [14/16] %v322, 128
        %387 = vxpose.xlu0.b32.cont [15/16] %v323, 128
        %388 = vxpose.xlu0.b32.end [16/16] %v324, 128
        %v389 = vpop.trf.xlu0
        %v390 = vpop.trf.xlu0
        %v391 = vpop.trf.xlu0
        %v392 = vpop.trf.xlu0
        %v393 = vpop.trf.xlu0
        %v394 = vpop.trf.xlu0
        %v395 = vpop.trf.xlu0
        %v396 = vpop.trf.xlu0
        %v397 = vpop.trf.xlu0
        %v398 = vpop.trf.xlu0
        %v399 = vpop.trf.xlu0
        %v400 = vpop.trf.xlu0
        %v401 = vpop.trf.xlu0
        %v402 = vpop.trf.xlu0
        %v403 = vpop.trf.xlu0
        %v404 = vpop.trf.xlu0
        %405 = vxpose.xlu0.b32.start [1/16] %v325, 128
        %406 = vxpose.xlu0.b32.cont [2/16] %v326, 128
        %407 = vxpose.xlu0.b32.cont [3/16] %v327, 128
        %408 = vxpose.xlu0.b32.cont [4/16] %v328, 128
        %409 = vxpose.xlu0.b32.cont [5/16] %v329, 128
        %410 = vxpose.xlu0.b32.cont [6/16] %v330, 128
        %411 = vxpose.xlu0.b32.cont [7/16] %v331, 128
        %412 = vxpose.xlu0.b32.cont [8/16] %v332, 128
        %413 = vxpose.xlu0.b32.cont [9/16] %v333, 128
        %414 = vxpose.xlu0.b32.cont [10/16] %v334, 128
        %415 = vxpose.xlu0.b32.cont [11/16] %v335, 128
        %416 = vxpose.xlu0.b32.cont [12/16] %v336, 128
        %417 = vxpose.xlu0.b32.cont [13/16] %v337, 128
        %418 = vxpose.xlu0.b32.cont [14/16] %v338, 128
        %419 = vxpose.xlu0.b32.cont [15/16] %v339, 128
        %420 = vxpose.xlu0.b32.end [16/16] %v340, 128
        %v421 = vpop.trf.xlu0
        %v422 = vpop.trf.xlu0
        %v423 = vpop.trf.xlu0
        %v424 = vpop.trf.xlu0
        %v425 = vpop.trf.xlu0
        %v426 = vpop.trf.xlu0
        %v427 = vpop.trf.xlu0
        %v428 = vpop.trf.xlu0
        %v429 = vpop.trf.xlu0
        %v430 = vpop.trf.xlu0
        %v431 = vpop.trf.xlu0
        %v432 = vpop.trf.xlu0
        %v433 = vpop.trf.xlu0
        %v434 = vpop.trf.xlu0
        %v435 = vpop.trf.xlu0
        %v436 = vpop.trf.xlu0
        %437 = vxpose.xlu0.b32.start [1/16] %v341, 128
        %438 = vxpose.xlu0.b32.cont [2/16] %v342, 128
        %439 = vxpose.xlu0.b32.cont [3/16] %v343, 128
        %440 = vxpose.xlu0.b32.cont [4/16] %v344, 128
        %441 = vxpose.xlu0.b32.cont [5/16] %v345, 128
        %442 = vxpose.xlu0.b32.cont [6/16] %v346, 128
        %443 = vxpose.xlu0.b32.cont [7/16] %v347, 128
        %444 = vxpose.xlu0.b32.cont [8/16] %v348, 128
        %445 = vxpose.xlu0.b32.cont [9/16] %v349, 128
        %446 = vxpose.xlu0.b32.cont [10/16] %v350, 128
        %447 = vxpose.xlu0.b32.cont [11/16] %v351, 128
        %448 = vxpose.xlu0.b32.cont [12/16] %v352, 128
        %449 = vxpose.xlu0.b32.cont [13/16] %v353, 128
        %450 = vxpose.xlu0.b32.cont [14/16] %v354, 128
        %451 = vxpose.xlu0.b32.cont [15/16] %v355, 128
        %452 = vxpose.xlu0.b32.end [16/16] %v356, 128
        %v453 = vpop.trf.xlu0
        %v454 = vpop.trf.xlu0
        %v455 = vpop.trf.xlu0
        %v456 = vpop.trf.xlu0
        %v457 = vpop.trf.xlu0
        %v458 = vpop.trf.xlu0
        %v459 = vpop.trf.xlu0
        %v460 = vpop.trf.xlu0
        %v461 = vpop.trf.xlu0
        %v462 = vpop.trf.xlu0
        %v463 = vpop.trf.xlu0
        %v464 = vpop.trf.xlu0
        %v465 = vpop.trf.xlu0
        %v466 = vpop.trf.xlu0
        %v467 = vpop.trf.xlu0
        %v468 = vpop.trf.xlu0
        %469 = vxpose.xlu0.b32.start [1/16] %v357, 128
        %470 = vxpose.xlu0.b32.cont [2/16] %v358, 128
        %471 = vxpose.xlu0.b32.cont [3/16] %v359, 128
        %472 = vxpose.xlu0.b32.cont [4/16] %v360, 128
        %473 = vxpose.xlu0.b32.cont [5/16] %v361, 128
        %474 = vxpose.xlu0.b32.cont [6/16] %v362, 128
        %475 = vxpose.xlu0.b32.cont [7/16] %v363, 128
        %476 = vxpose.xlu0.b32.cont [8/16] %v364, 128
        %477 = vxpose.xlu0.b32.cont [9/16] %v365, 128
        %478 = vxpose.xlu0.b32.cont [10/16] %v366, 128
        %479 = vxpose.xlu0.b32.cont [11/16] %v367, 128
        %480 = vxpose.xlu0.b32.cont [12/16] %v368, 128
        %481 = vxpose.xlu0.b32.cont [13/16] %v369, 128
        %482 = vxpose.xlu0.b32.cont [14/16] %v370, 128
        %483 = vxpose.xlu0.b32.cont [15/16] %v371, 128
        %484 = vxpose.xlu0.b32.end [16/16] %v372, 128
        %v485 = vpop.trf.xlu0
        %v486 = vpop.trf.xlu0
        %v487 = vpop.trf.xlu0
        %v488 = vpop.trf.xlu0
        %v489 = vpop.trf.xlu0
        %v490 = vpop.trf.xlu0
        %v491 = vpop.trf.xlu0
        %v492 = vpop.trf.xlu0
        %v493 = vpop.trf.xlu0
        %v494 = vpop.trf.xlu0
        %v495 = vpop.trf.xlu0
        %v496 = vpop.trf.xlu0
        %v497 = vpop.trf.xlu0
        %v498 = vpop.trf.xlu0
        %v499 = vpop.trf.xlu0
        %v500 = vpop.trf.xlu0
        %v501 = vld [vmem:[%s3] sm:$0xf]
        %v502 = vld [vmem:[%s3 + $0x4] sm:$0xf]
        %v503 = vld [vmem:[%s3 + $0x8] sm:$0xf]
        %v504 = vld [vmem:[%s3 + $0xc] sm:$0xf]
        %v505 = vpack.c.bf16 %v390, %v389
        %v506 = vpack.c.bf16 %v422, %v421
        %v507 = vpack.c.bf16 %v454, %v453
        %v508 = vpack.c.bf16 %v486, %v485
        %v509 = vld [vmem:[%s6] sm:$0xff]
        %v510 = vld [vmem:[%s6 + $0x8] sm:$0xff]
        %v511 = vld [vmem:[%s6 + $0x10] sm:$0xff]
        %v512 = vld [vmem:[%s6 + $0x18] sm:$0xff]
        %514 = vset.pattern.permute.xlu0 0
        %515 = vperm.xlu0 %514, %v509
        %v516 = vpop.permute.xlu0 %515
        %519 = vset.pattern.permute.xlu0 0
        %520 = vperm.xlu0 %519, %v510
        %v521 = vpop.permute.xlu0 %520
        %524 = vset.pattern.permute.xlu0 0
        %525 = vperm.xlu0 %524, %v511
        %v526 = vpop.permute.xlu0 %525
        %529 = vset.pattern.permute.xlu0 0
        %530 = vperm.xlu0 %529, %v512
        %v531 = vpop.permute.xlu0 %530
        %v537 = vunpack.c.l.b16 %v501
        %v538 = vunpack.c.l.b16 %v502
        %v539 = vunpack.c.l.b16 %v503
        %v540 = vunpack.c.l.b16 %v504
        %v541 = vpack.c.b16 %v538, %v537
        %v542 = vpack.c.b16 %v540, %v539
        %vm543 = vcmask 130048
        %v545 = vsel %vm543, %v541, 0
        %v548 = vsel %vm543, %v542, 0
        %550 = vmatprep.subr.bf16.mxu0 0
        %551 = vmatpush1.bf16.msra.mxu0 0
        %552 = vmatprep.subr.bf16.mxu0 0
        %553 = vmatpush1.bf16.msra.mxu0 0
        %554 = vmatprep.subr.bf16.mxu0 0
        %555 = vmatpush1.bf16.msra.mxu0 0
        %556 = vmatprep.subr.bf16.mxu0 0
        %557 = vmatpush1.bf16.msra.mxu0 0
        %558 = vmatprep.subr.bf16.mxu0 0
        %559 = vmatpush1.bf16.msra.mxu0 0
        %560 = vmatprep.subr.bf16.mxu0 0
        %561 = vmatpush1.bf16.msra.mxu0 0
        %562 = vmatprep.subr.bf16.mxu0 0
        %563 = vmatpush1.bf16.msra.mxu0 0
        %564 = vmatprep.subr.bf16.mxu0 %v506
        %565 = vmatpush1.bf16.msra.mxu0 %v505
        %566 = vmatprep.subr.bf16.mxu0 0
        %567 = vmatpush2.bf16.msra.mxu0 0
        %568 = vmatprep.subr.bf16.mxu0 0
        %569 = vmatpush2.bf16.msra.mxu0 0
        %570 = vmatprep.subr.bf16.mxu0 0
        %571 = vmatpush2.bf16.msra.mxu0 0
        %572 = vmatprep.subr.bf16.mxu0 0
        %573 = vmatpush2.bf16.msra.mxu0 0
        %574 = vmatprep.subr.bf16.mxu0 0
        %575 = vmatpush2.bf16.msra.mxu0 0
        %576 = vmatprep.subr.bf16.mxu0 0
        %577 = vmatpush2.bf16.msra.mxu0 0
        %578 = vmatprep.subr.bf16.mxu0 0
        %579 = vmatpush2.bf16.msra.mxu0 0
        %580 = vmatprep.subr.bf16.mxu0 0
        %581 = vmatpush2.bf16.msra.mxu0 0
        %582 = vmatprep.mubr.bf16.mxu0 0
        %583 = vmatmul.mubr.bf16.gmra.mxu0 %v545
        %v584 = vpop.f32.mrf.mxu0
        %v585 = vadd.f32 %v516, %v584
        %v586 = vpop.f32.mrf.mxu0
        %v587 = vadd.f32 %v516, %v586
        %v588 = vpop.f32.mrf.mxu0
        %v589 = vadd.f32 %v521, %v588
        %v590 = vpop.f32.mrf.mxu0
        %v591 = vadd.f32 %v521, %v590
        %592 = vmatprep.mubr.bf16.mxu0 0
        %593 = vmatmul.mubr.bf16.gmra.mxu0 %v548
        %v594 = vpop.f32.mrf.mxu0
        %v595 = vadd.f32 %v526, %v594
        %v596 = vpop.f32.mrf.mxu0
        %v597 = vadd.f32 %v526, %v596
        %v598 = vpop.f32.mrf.mxu0
        %v599 = vadd.f32 %v531, %v598
        %v600 = vpop.f32.mrf.mxu0
        %v601 = vadd.f32 %v531, %v600
        %602 = vdwg.mxu0
        %603 = vmatprep.subr.bf16.mxu0 0
        %604 = vmatpush1.bf16.msra.mxu0 0
        %605 = vmatprep.subr.bf16.mxu0 0
        %606 = vmatpush1.bf16.msra.mxu0 0
        %607 = vmatprep.subr.bf16.mxu0 0
        %608 = vmatpush1.bf16.msra.mxu0 0
        %609 = vmatprep.subr.bf16.mxu0 0
        %610 = vmatpush1.bf16.msra.mxu0 0
        %611 = vmatprep.subr.bf16.mxu0 0
        %612 = vmatpush1.bf16.msra.mxu0 0
        %613 = vmatprep.subr.bf16.mxu0 0
        %614 = vmatpush1.bf16.msra.mxu0 0
        %615 = vmatprep.subr.bf16.mxu0 0
        %616 = vmatpush1.bf16.msra.mxu0 0
        %617 = vmatprep.subr.bf16.mxu0 %v508
        %618 = vmatpush1.bf16.msra.mxu0 %v507
        %619 = vmatprep.subr.bf16.mxu0 0
        %620 = vmatpush2.bf16.msra.mxu0 0
        %621 = vmatprep.subr.bf16.mxu0 0
        %622 = vmatpush2.bf16.msra.mxu0 0
        %623 = vmatprep.subr.bf16.mxu0 0
        %624 = vmatpush2.bf16.msra.mxu0 0
        %625 = vmatprep.subr.bf16.mxu0 0
        %626 = vmatpush2.bf16.msra.mxu0 0
        %627 = vmatprep.subr.bf16.mxu0 0
        %628 = vmatpush2.bf16.msra.mxu0 0
        %629 = vmatprep.subr.bf16.mxu0 0
        %630 = vmatpush2.bf16.msra.mxu0 0
        %631 = vmatprep.subr.bf16.mxu0 0
        %632 = vmatpush2.bf16.msra.mxu0 0
        %633 = vmatprep.subr.bf16.mxu0 0
        %634 = vmatpush2.bf16.msra.mxu0 0
        %635 = vmatprep.mubr.bf16.mxu0 0
        %636 = vmatmul.mubr.bf16.gmra.mxu0 %v545
        %v637 = vpop.f32.mrf.mxu0
        %v638 = vadd.f32 %v516, %v637
        %v639 = vpop.f32.mrf.mxu0
        %v640 = vadd.f32 %v516, %v639
        %v641 = vpop.f32.mrf.mxu0
        %v642 = vadd.f32 %v521, %v641
        %v643 = vpop.f32.mrf.mxu0
        %v644 = vadd.f32 %v521, %v643
        %645 = vmatprep.mubr.bf16.mxu0 0
        %646 = vmatmul.mubr.bf16.gmra.mxu0 %v548
        %v647 = vpop.f32.mrf.mxu0
        %v648 = vadd.f32 %v526, %v647
        %v649 = vpop.f32.mrf.mxu0
        %v650 = vadd.f32 %v526, %v649
        %v651 = vpop.f32.mrf.mxu0
        %v652 = vadd.f32 %v531, %v651
        %v653 = vpop.f32.mrf.mxu0
        %v654 = vadd.f32 %v531, %v653
        %655 = vdwg.mxu0
        %v656 = vmax.f32 %v585, 0.0
        %v657 = vmax.f32 %v587, 0.0
        %v658 = vmax.f32 %v638, 0.0
        %v659 = vmax.f32 %v640, 0.0
        %v660 = vmax.f32 %v589, 0.0
        %v661 = vmax.f32 %v591, 0.0
        %v662 = vmax.f32 %v642, 0.0
        %v663 = vmax.f32 %v644, 0.0
        %v664 = vmax.f32 %v595, 0.0
        %v665 = vmax.f32 %v597, 0.0
        %v666 = vmax.f32 %v648, 0.0
        %v667 = vmax.f32 %v650, 0.0
        %v668 = vmax.f32 %v599, 0.0
        %v669 = vmax.f32 %v601, 0.0
        %v670 = vmax.f32 %v652, 0.0
        %v671 = vmax.f32 %v654, 0.0
        %v672 = vld [vmem:[%s4] sm:$0xf]
        %v673 = vld [vmem:[%s4 + $0x4] sm:$0xf]
        %v674 = vld [vmem:[%s4 + $0x8] sm:$0xf]
        %v675 = vld [vmem:[%s4 + $0xc] sm:$0xf]
        %v676 = vpack.c.bf16 %v660, %v656
        %v677 = vpack.c.bf16 %v661, %v657
        %v678 = vpack.c.bf16 %v662, %v658
        %v679 = vpack.c.bf16 %v663, %v659
        %v680 = vpack.c.bf16 %v668, %v664
        %v681 = vpack.c.bf16 %v669, %v665
        %v682 = vpack.c.bf16 %v670, %v666
        %v683 = vpack.c.bf16 %v671, %v667
        %s684 = scalar_lea.vmem %s6, 32
        %v685 = vld [vmem:[%s684] sm:$0xff]
        %v686 = vld [vmem:[%s684 + $0x8] sm:$0xff]
        %v687 = vld [vmem:[%s684 + $0x10] sm:$0xff]
        %v688 = vld [vmem:[%s684 + $0x18] sm:$0xff]
        %690 = vset.pattern.permute.xlu0 0
        %691 = vperm.xlu0 %690, %v685
        %v692 = vpop.permute.xlu0 %691
        %695 = vset.pattern.permute.xlu0 0
        %696 = vperm.xlu0 %695, %v686
        %v697 = vpop.permute.xlu0 %696
        %700 = vset.pattern.permute.xlu0 0
        %701 = vperm.xlu0 %700, %v687
        %v702 = vpop.permute.xlu0 %701
        %705 = vset.pattern.permute.xlu0 0
        %706 = vperm.xlu0 %705, %v688
        %v707 = vpop.permute.xlu0 %706
        %v713 = vunpack.c.l.b16 %v672
        %v714 = vunpack.c.l.b16 %v673
        %v715 = vunpack.c.l.b16 %v674
        %v716 = vunpack.c.l.b16 %v675
        %v717 = vpack.c.b16 %v714, %v713
        %v718 = vpack.c.b16 %v716, %v715
        %vm719 = vcmask 261120
        %v721 = vsel %vm719, %v717, 0
        %v724 = vsel %vm719, %v718, 0
        %726 = vmatprep.subr.bf16.mxu0 0
        %727 = vmatpush1.bf16.msra.mxu0 0
        %728 = vmatprep.subr.bf16.mxu0 0
        %729 = vmatpush1.bf16.msra.mxu0 0
        %730 = vmatprep.subr.bf16.mxu0 0
        %731 = vmatpush1.bf16.msra.mxu0 0
        %732 = vmatprep.subr.bf16.mxu0 0
        %733 = vmatpush1.bf16.msra.mxu0 0
        %734 = vmatprep.subr.bf16.mxu0 0
        %735 = vmatpush1.bf16.msra.mxu0 0
        %736 = vmatprep.subr.bf16.mxu0 0
        %737 = vmatpush1.bf16.msra.mxu0 0
        %738 = vmatprep.subr.bf16.mxu0 %v681
        %739 = vmatpush1.bf16.msra.mxu0 %v680
        %740 = vmatprep.subr.bf16.mxu0 %v677
        %741 = vmatpush1.bf16.msra.mxu0 %v676
        %742 = vmatprep.subr.bf16.mxu0 0
        %743 = vmatpush2.bf16.msra.mxu0 0
        %744 = vmatprep.subr.bf16.mxu0 0
        %745 = vmatpush2.bf16.msra.mxu0 0
        %746 = vmatprep.subr.bf16.mxu0 0
        %747 = vmatpush2.bf16.msra.mxu0 0
        %748 = vmatprep.subr.bf16.mxu0 0
        %749 = vmatpush2.bf16.msra.mxu0 0
        %750 = vmatprep.subr.bf16.mxu0 0
        %751 = vmatpush2.bf16.msra.mxu0 0
        %752 = vmatprep.subr.bf16.mxu0 0
        %753 = vmatpush2.bf16.msra.mxu0 0
        %754 = vmatprep.subr.bf16.mxu0 0
        %755 = vmatpush2.bf16.msra.mxu0 0
        %756 = vmatprep.subr.bf16.mxu0 0
        %757 = vmatpush2.bf16.msra.mxu0 0
        %758 = vmatprep.mubr.bf16.mxu0 0
        %759 = vmatmul.mubr.bf16.gmra.mxu0 %v721
        %v760 = vpop.f32.mrf.mxu0
        %v761 = vadd.f32 %v692, %v760
        %v762 = vpop.f32.mrf.mxu0
        %v763 = vadd.f32 %v692, %v762
        %v764 = vpop.f32.mrf.mxu0
        %v765 = vadd.f32 %v697, %v764
        %v766 = vpop.f32.mrf.mxu0
        %v767 = vadd.f32 %v697, %v766
        %768 = vmatprep.mubr.bf16.mxu0 0
        %769 = vmatmul.mubr.bf16.gmra.mxu0 %v724
        %v770 = vpop.f32.mrf.mxu0
        %v771 = vadd.f32 %v702, %v770
        %v772 = vpop.f32.mrf.mxu0
        %v773 = vadd.f32 %v702, %v772
        %v774 = vpop.f32.mrf.mxu0
        %v775 = vadd.f32 %v707, %v774
        %v776 = vpop.f32.mrf.mxu0
        %v777 = vadd.f32 %v707, %v776
        %778 = vdwg.mxu0
        %779 = vmatprep.subr.bf16.mxu0 0
        %780 = vmatpush1.bf16.msra.mxu0 0
        %781 = vmatprep.subr.bf16.mxu0 0
        %782 = vmatpush1.bf16.msra.mxu0 0
        %783 = vmatprep.subr.bf16.mxu0 0
        %784 = vmatpush1.bf16.msra.mxu0 0
        %785 = vmatprep.subr.bf16.mxu0 0
        %786 = vmatpush1.bf16.msra.mxu0 0
        %787 = vmatprep.subr.bf16.mxu0 0
        %788 = vmatpush1.bf16.msra.mxu0 0
        %789 = vmatprep.subr.bf16.mxu0 0
        %790 = vmatpush1.bf16.msra.mxu0 0
        %791 = vmatprep.subr.bf16.mxu0 %v683
        %792 = vmatpush1.bf16.msra.mxu0 %v682
        %793 = vmatprep.subr.bf16.mxu0 %v679
        %794 = vmatpush1.bf16.msra.mxu0 %v678
        %795 = vmatprep.subr.bf16.mxu0 0
        %796 = vmatpush2.bf16.msra.mxu0 0
        %797 = vmatprep.subr.bf16.mxu0 0
        %798 = vmatpush2.bf16.msra.mxu0 0
        %799 = vmatprep.subr.bf16.mxu0 0
        %800 = vmatpush2.bf16.msra.mxu0 0
        %801 = vmatprep.subr.bf16.mxu0 0
        %802 = vmatpush2.bf16.msra.mxu0 0
        %803 = vmatprep.subr.bf16.mxu0 0
        %804 = vmatpush2.bf16.msra.mxu0 0
        %805 = vmatprep.subr.bf16.mxu0 0
        %806 = vmatpush2.bf16.msra.mxu0 0
        %807 = vmatprep.subr.bf16.mxu0 0
        %808 = vmatpush2.bf16.msra.mxu0 0
        %809 = vmatprep.subr.bf16.mxu0 0
        %810 = vmatpush2.bf16.msra.mxu0 0
        %811 = vmatprep.mubr.bf16.mxu0 0
        %812 = vmatmul.mubr.bf16.gmra.mxu0 %v721
        %v813 = vpop.f32.mrf.mxu0
        %v814 = vadd.f32 %v692, %v813
        %v815 = vpop.f32.mrf.mxu0
        %v816 = vadd.f32 %v692, %v815
        %v817 = vpop.f32.mrf.mxu0
        %v818 = vadd.f32 %v697, %v817
        %v819 = vpop.f32.mrf.mxu0
        %v820 = vadd.f32 %v697, %v819
        %821 = vmatprep.mubr.bf16.mxu0 0
        %822 = vmatmul.mubr.bf16.gmra.mxu0 %v724
        %v823 = vpop.f32.mrf.mxu0
        %v824 = vadd.f32 %v702, %v823
        %v825 = vpop.f32.mrf.mxu0
        %v826 = vadd.f32 %v702, %v825
        %v827 = vpop.f32.mrf.mxu0
        %v828 = vadd.f32 %v707, %v827
        %v829 = vpop.f32.mrf.mxu0
        %v830 = vadd.f32 %v707, %v829
        %831 = vdwg.mxu0
        %v832 = vmax.f32 %v761, 0.0
        %v833 = vmax.f32 %v763, 0.0
        %v834 = vmax.f32 %v814, 0.0
        %v835 = vmax.f32 %v816, 0.0
        %v836 = vmax.f32 %v765, 0.0
        %v837 = vmax.f32 %v767, 0.0
        %v838 = vmax.f32 %v818, 0.0
        %v839 = vmax.f32 %v820, 0.0
        %v840 = vmax.f32 %v771, 0.0
        %v841 = vmax.f32 %v773, 0.0
        %v842 = vmax.f32 %v824, 0.0
        %v843 = vmax.f32 %v826, 0.0
        %v844 = vmax.f32 %v775, 0.0
        %v845 = vmax.f32 %v777, 0.0
        %v846 = vmax.f32 %v828, 0.0
        %v847 = vmax.f32 %v830, 0.0
        %v848 = vld [vmem:[%s5] sm:$0xf]
        %v849 = vld [vmem:[%s5 + $0x4] sm:$0xf]
        %v850 = vpack.c.bf16 %v836, %v832
        %v851 = vpack.c.bf16 %v837, %v833
        %v852 = vpack.c.bf16 %v838, %v834
        %v853 = vpack.c.bf16 %v839, %v835
        %v854 = vpack.c.bf16 %v844, %v840
        %v855 = vpack.c.bf16 %v845, %v841
        %v856 = vpack.c.bf16 %v846, %v842
        %v857 = vpack.c.bf16 %v847, %v843
        %v858 = vld [vmem:[%s7] sm:$0xff]
        %v859 = vld [vmem:[%s7 + $0x8] sm:$0xff]
        %861 = vset.pattern.permute.xlu0 0
        %862 = vperm.xlu0 %861, %v858
        %v863 = vpop.permute.xlu0 %862
        %866 = vset.pattern.permute.xlu0 0
        %867 = vperm.xlu0 %866, %v859
        %v868 = vpop.permute.xlu0 %867
        %v872 = vunpack.c.l.b16 %v848
        %v873 = vunpack.c.l.b16 %v849
        %v874 = vpack.c.b16 %v873, %v872
        %v876 = vsel %vm719, %v874, 0
        %878 = vmatprep.subr.bf16.mxu0 0
        %879 = vmatpush1.bf16.msra.mxu0 0
        %880 = vmatprep.subr.bf16.mxu0 0
        %881 = vmatpush1.bf16.msra.mxu0 0
        %882 = vmatprep.subr.bf16.mxu0 0
        %883 = vmatpush1.bf16.msra.mxu0 0
        %884 = vmatprep.subr.bf16.mxu0 0
        %885 = vmatpush1.bf16.msra.mxu0 0
        %886 = vmatprep.subr.bf16.mxu0 0
        %887 = vmatpush1.bf16.msra.mxu0 0
        %888 = vmatprep.subr.bf16.mxu0 0
        %889 = vmatpush1.bf16.msra.mxu0 0
        %890 = vmatprep.subr.bf16.mxu0 %v855
        %891 = vmatpush1.bf16.msra.mxu0 %v854
        %892 = vmatprep.subr.bf16.mxu0 %v851
        %893 = vmatpush1.bf16.msra.mxu0 %v850
        %894 = vmatprep.subr.bf16.mxu0 0
        %895 = vmatpush2.bf16.msra.mxu0 0
        %896 = vmatprep.subr.bf16.mxu0 0
        %897 = vmatpush2.bf16.msra.mxu0 0
        %898 = vmatprep.subr.bf16.mxu0 0
        %899 = vmatpush2.bf16.msra.mxu0 0
        %900 = vmatprep.subr.bf16.mxu0 0
        %901 = vmatpush2.bf16.msra.mxu0 0
        %902 = vmatprep.subr.bf16.mxu0 0
        %903 = vmatpush2.bf16.msra.mxu0 0
        %904 = vmatprep.subr.bf16.mxu0 0
        %905 = vmatpush2.bf16.msra.mxu0 0
        %906 = vmatprep.subr.bf16.mxu0 0
        %907 = vmatpush2.bf16.msra.mxu0 0
        %908 = vmatprep.subr.bf16.mxu0 0
        %909 = vmatpush2.bf16.msra.mxu0 0
        %910 = vmatprep.mubr.bf16.mxu0 0
        %911 = vmatmul.mubr.bf16.gmra.mxu0 %v876
        %v912 = vpop.f32.mrf.mxu0
        %v913 = vadd.f32 %v863, %v912
        %v914 = vpop.f32.mrf.mxu0
        %v915 = vadd.f32 %v863, %v914
        %v916 = vpop.f32.mrf.mxu0
        %v917 = vadd.f32 %v868, %v916
        %v918 = vpop.f32.mrf.mxu0
        %v919 = vadd.f32 %v868, %v918
        %920 = vdwg.mxu0
        %921 = vmatprep.subr.bf16.mxu0 0
        %922 = vmatpush1.bf16.msra.mxu0 0
        %923 = vmatprep.subr.bf16.mxu0 0
        %924 = vmatpush1.bf16.msra.mxu0 0
        %925 = vmatprep.subr.bf16.mxu0 0
        %926 = vmatpush1.bf16.msra.mxu0 0
        %927 = vmatprep.subr.bf16.mxu0 0
        %928 = vmatpush1.bf16.msra.mxu0 0
        %929 = vmatprep.subr.bf16.mxu0 0
        %930 = vmatpush1.bf16.msra.mxu0 0
        %931 = vmatprep.subr.bf16.mxu0 0
        %932 = vmatpush1.bf16.msra.mxu0 0
        %933 = vmatprep.subr.bf16.mxu0 %v857
        %934 = vmatpush1.bf16.msra.mxu0 %v856
        %935 = vmatprep.subr.bf16.mxu0 %v853
        %936 = vmatpush1.bf16.msra.mxu0 %v852
        %937 = vmatprep.subr.bf16.mxu0 0
        %938 = vmatpush2.bf16.msra.mxu0 0
        %939 = vmatprep.subr.bf16.mxu0 0
        %940 = vmatpush2.bf16.msra.mxu0 0
        %941 = vmatprep.subr.bf16.mxu0 0
        %942 = vmatpush2.bf16.msra.mxu0 0
        %943 = vmatprep.subr.bf16.mxu0 0
        %944 = vmatpush2.bf16.msra.mxu0 0
        %945 = vmatprep.subr.bf16.mxu0 0
        %946 = vmatpush2.bf16.msra.mxu0 0
        %947 = vmatprep.subr.bf16.mxu0 0
        %948 = vmatpush2.bf16.msra.mxu0 0
        %949 = vmatprep.subr.bf16.mxu0 0
        %950 = vmatpush2.bf16.msra.mxu0 0
        %951 = vmatprep.subr.bf16.mxu0 0
        %952 = vmatpush2.bf16.msra.mxu0 0
        %953 = vmatprep.mubr.bf16.mxu0 0
        %954 = vmatmul.mubr.bf16.gmra.mxu0 %v876
        %v955 = vpop.f32.mrf.mxu0
        %v956 = vadd.f32 %v863, %v955
        %v957 = vpop.f32.mrf.mxu0
        %v958 = vadd.f32 %v863, %v957
        %v959 = vpop.f32.mrf.mxu0
        %v960 = vadd.f32 %v868, %v959
        %v961 = vpop.f32.mrf.mxu0
        %v962 = vadd.f32 %v868, %v961
        %963 = vdwg.mxu0
        %v964 = vadd.f32 %v389, %v913
        %v965 = vadd.f32 %v421, %v915
        %v966 = vadd.f32 %v453, %v956
        %v967 = vadd.f32 %v485, %v958
        %v968 = vadd.f32 %v390, %v917
        %v969 = vadd.f32 %v422, %v919
        %v970 = vadd.f32 %v454, %v960
        %v971 = vadd.f32 %v486, %v962
        %s972 = scalar_lea.vmem %s3, 16
        %v973 = vld [vmem:[%s972] sm:$0xf]
        %v974 = vld [vmem:[%s972 + $0x4] sm:$0xf]
        %v975 = vld [vmem:[%s972 + $0x8] sm:$0xf]
        %v976 = vld [vmem:[%s972 + $0xc] sm:$0xf]
        %v977 = vpack.c.bf16 %v968, %v964
        %v978 = vpack.c.bf16 %v969, %v965
        %v979 = vpack.c.bf16 %v970, %v966
        %v980 = vpack.c.bf16 %v971, %v967
        %s981 = scalar_lea.vmem %s6, 64
        %v982 = vld [vmem:[%s981] sm:$0xff]
        %v983 = vld [vmem:[%s981 + $0x8] sm:$0xff]
        %v984 = vld [vmem:[%s981 + $0x10] sm:$0xff]
        %v985 = vld [vmem:[%s981 + $0x18] sm:$0xff]
        %987 = vset.pattern.permute.xlu0 0
        %988 = vperm.xlu0 %987, %v982
        %v989 = vpop.permute.xlu0 %988
        %992 = vset.pattern.permute.xlu0 0
        %993 = vperm.xlu0 %992, %v983
        %v994 = vpop.permute.xlu0 %993
        %997 = vset.pattern.permute.xlu0 0
        %998 = vperm.xlu0 %997, %v984
        %v999 = vpop.permute.xlu0 %998
        %1002 = vset.pattern.permute.xlu0 0
        %1003 = vperm.xlu0 %1002, %v985
        %v1004 = vpop.permute.xlu0 %1003
        %v1010 = vunpack.c.l.b16 %v973
        %v1011 = vunpack.c.l.b16 %v974
        %v1012 = vunpack.c.l.b16 %v975
        %v1013 = vunpack.c.l.b16 %v976
        %v1014 = vpack.c.b16 %v1011, %v1010
        %v1015 = vpack.c.b16 %v1013, %v1012
        %v1017 = vsel %vm543, %v1014, 0
        %v1020 = vsel %vm543, %v1015, 0
        %1022 = vmatprep.subr.bf16.mxu0 0
        %1023 = vmatpush1.bf16.msra.mxu0 0
        %1024 = vmatprep.subr.bf16.mxu0 0
        %1025 = vmatpush1.bf16.msra.mxu0 0
        %1026 = vmatprep.subr.bf16.mxu0 0
        %1027 = vmatpush1.bf16.msra.mxu0 0
        %1028 = vmatprep.subr.bf16.mxu0 0
        %1029 = vmatpush1.bf16.msra.mxu0 0
        %1030 = vmatprep.subr.bf16.mxu0 0
        %1031 = vmatpush1.bf16.msra.mxu0 0
        %1032 = vmatprep.subr.bf16.mxu0 0
        %1033 = vmatpush1.bf16.msra.mxu0 0
        %1034 = vmatprep.subr.bf16.mxu0 0
        %1035 = vmatpush1.bf16.msra.mxu0 0
        %1036 = vmatprep.subr.bf16.mxu0 %v978
        %1037 = vmatpush1.bf16.msra.mxu0 %v977
        %1038 = vmatprep.subr.bf16.mxu0 0
        %1039 = vmatpush2.bf16.msra.mxu0 0
        %1040 = vmatprep.subr.bf16.mxu0 0
        %1041 = vmatpush2.bf16.msra.mxu0 0
        %1042 = vmatprep.subr.bf16.mxu0 0
        %1043 = vmatpush2.bf16.msra.mxu0 0
        %1044 = vmatprep.subr.bf16.mxu0 0
        %1045 = vmatpush2.bf16.msra.mxu0 0
        %1046 = vmatprep.subr.bf16.mxu0 0
        %1047 = vmatpush2.bf16.msra.mxu0 0
        %1048 = vmatprep.subr.bf16.mxu0 0
        %1049 = vmatpush2.bf16.msra.mxu0 0
        %1050 = vmatprep.subr.bf16.mxu0 0
        %1051 = vmatpush2.bf16.msra.mxu0 0
        %1052 = vmatprep.subr.bf16.mxu0 0
        %1053 = vmatpush2.bf16.msra.mxu0 0
        %1054 = vmatprep.mubr.bf16.mxu0 0
        %1055 = vmatmul.mubr.bf16.gmra.mxu0 %v1017
        %v1056 = vpop.f32.mrf.mxu0
        %v1057 = vadd.f32 %v989, %v1056
        %v1058 = vpop.f32.mrf.mxu0
        %v1059 = vadd.f32 %v989, %v1058
        %v1060 = vpop.f32.mrf.mxu0
        %v1061 = vadd.f32 %v994, %v1060
        %v1062 = vpop.f32.mrf.mxu0
        %v1063 = vadd.f32 %v994, %v1062
        %1064 = vmatprep.mubr.bf16.mxu0 0
        %1065 = vmatmul.mubr.bf16.gmra.mxu0 %v1020
        %v1066 = vpop.f32.mrf.mxu0
        %v1067 = vadd.f32 %v999, %v1066
        %v1068 = vpop.f32.mrf.mxu0
        %v1069 = vadd.f32 %v999, %v1068
        %v1070 = vpop.f32.mrf.mxu0
        %v1071 = vadd.f32 %v1004, %v1070
        %v1072 = vpop.f32.mrf.mxu0
        %v1073 = vadd.f32 %v1004, %v1072
        %1074 = vdwg.mxu0
        %1075 = vmatprep.subr.bf16.mxu0 0
        %1076 = vmatpush1.bf16.msra.mxu0 0
        %1077 = vmatprep.subr.bf16.mxu0 0
        %1078 = vmatpush1.bf16.msra.mxu0 0
        %1079 = vmatprep.subr.bf16.mxu0 0
        %1080 = vmatpush1.bf16.msra.mxu0 0
        %1081 = vmatprep.subr.bf16.mxu0 0
        %1082 = vmatpush1.bf16.msra.mxu0 0
        %1083 = vmatprep.subr.bf16.mxu0 0
        %1084 = vmatpush1.bf16.msra.mxu0 0
        %1085 = vmatprep.subr.bf16.mxu0 0
        %1086 = vmatpush1.bf16.msra.mxu0 0
        %1087 = vmatprep.subr.bf16.mxu0 0
        %1088 = vmatpush1.bf16.msra.mxu0 0
        %1089 = vmatprep.subr.bf16.mxu0 %v980
        %1090 = vmatpush1.bf16.msra.mxu0 %v979
        %1091 = vmatprep.subr.bf16.mxu0 0
        %1092 = vmatpush2.bf16.msra.mxu0 0
        %1093 = vmatprep.subr.bf16.mxu0 0
        %1094 = vmatpush2.bf16.msra.mxu0 0
        %1095 = vmatprep.subr.bf16.mxu0 0
        %1096 = vmatpush2.bf16.msra.mxu0 0
        %1097 = vmatprep.subr.bf16.mxu0 0
        %1098 = vmatpush2.bf16.msra.mxu0 0
        %1099 = vmatprep.subr.bf16.mxu0 0
        %1100 = vmatpush2.bf16.msra.mxu0 0
        %1101 = vmatprep.subr.bf16.mxu0 0
        %1102 = vmatpush2.bf16.msra.mxu0 0
        %1103 = vmatprep.subr.bf16.mxu0 0
        %1104 = vmatpush2.bf16.msra.mxu0 0
        %1105 = vmatprep.subr.bf16.mxu0 0
        %1106 = vmatpush2.bf16.msra.mxu0 0
        %1107 = vmatprep.mubr.bf16.mxu0 0
        %1108 = vmatmul.mubr.bf16.gmra.mxu0 %v1017
        %v1109 = vpop.f32.mrf.mxu0
        %v1110 = vadd.f32 %v989, %v1109
        %v1111 = vpop.f32.mrf.mxu0
        %v1112 = vadd.f32 %v989, %v1111
        %v1113 = vpop.f32.mrf.mxu0
        %v1114 = vadd.f32 %v994, %v1113
        %v1115 = vpop.f32.mrf.mxu0
        %v1116 = vadd.f32 %v994, %v1115
        %1117 = vmatprep.mubr.bf16.mxu0 0
        %1118 = vmatmul.mubr.bf16.gmra.mxu0 %v1020
        %v1119 = vpop.f32.mrf.mxu0
        %v1120 = vadd.f32 %v999, %v1119
        %v1121 = vpop.f32.mrf.mxu0
        %v1122 = vadd.f32 %v999, %v1121
        %v1123 = vpop.f32.mrf.mxu0
        %v1124 = vadd.f32 %v1004, %v1123
        %v1125 = vpop.f32.mrf.mxu0
        %v1126 = vadd.f32 %v1004, %v1125
        %1127 = vdwg.mxu0
        %v1128 = vmax.f32 %v1057, 0.0
        %v1129 = vmax.f32 %v1059, 0.0
        %v1130 = vmax.f32 %v1110, 0.0
        %v1131 = vmax.f32 %v1112, 0.0
        %v1132 = vmax.f32 %v1061, 0.0
        %v1133 = vmax.f32 %v1063, 0.0
        %v1134 = vmax.f32 %v1114, 0.0
        %v1135 = vmax.f32 %v1116, 0.0
        %v1136 = vmax.f32 %v1067, 0.0
        %v1137 = vmax.f32 %v1069, 0.0
        %v1138 = vmax.f32 %v1120, 0.0
        %v1139 = vmax.f32 %v1122, 0.0
        %v1140 = vmax.f32 %v1071, 0.0
        %v1141 = vmax.f32 %v1073, 0.0
        %v1142 = vmax.f32 %v1124, 0.0
        %v1143 = vmax.f32 %v1126, 0.0
        %s1144 = scalar_lea.vmem %s4, 16
        %v1145 = vld [vmem:[%s1144] sm:$0xf]
        %v1146 = vld [vmem:[%s1144 + $0x4] sm:$0xf]
        %v1147 = vld [vmem:[%s1144 + $0x8] sm:$0xf]
        %v1148 = vld [vmem:[%s1144 + $0xc] sm:$0xf]
        %v1149 = vpack.c.bf16 %v1132, %v1128
        %v1150 = vpack.c.bf16 %v1133, %v1129
        %v1151 = vpack.c.bf16 %v1134, %v1130
        %v1152 = vpack.c.bf16 %v1135, %v1131
        %v1153 = vpack.c.bf16 %v1140, %v1136
        %v1154 = vpack.c.bf16 %v1141, %v1137
        %v1155 = vpack.c.bf16 %v1142, %v1138
        %v1156 = vpack.c.bf16 %v1143, %v1139
        %s1157 = scalar_lea.vmem %s6, 96
        %v1158 = vld [vmem:[%s1157] sm:$0xff]
        %v1159 = vld [vmem:[%s1157 + $0x8] sm:$0xff]
        %v1160 = vld [vmem:[%s1157 + $0x10] sm:$0xff]
        %v1161 = vld [vmem:[%s1157 + $0x18] sm:$0xff]
        %1163 = vset.pattern.permute.xlu0 0
        %1164 = vperm.xlu0 %1163, %v1158
        %v1165 = vpop.permute.xlu0 %1164
        %1168 = vset.pattern.permute.xlu0 0
        %1169 = vperm.xlu0 %1168, %v1159
        %v1170 = vpop.permute.xlu0 %1169
        %1173 = vset.pattern.permute.xlu0 0
        %1174 = vperm.xlu0 %1173, %v1160
        %v1175 = vpop.permute.xlu0 %1174
        %1178 = vset.pattern.permute.xlu0 0
        %1179 = vperm.xlu0 %1178, %v1161
        %v1180 = vpop.permute.xlu0 %1179
        %v1186 = vunpack.c.l.b16 %v1145
        %v1187 = vunpack.c.l.b16 %v1146
        %v1188 = vunpack.c.l.b16 %v1147
        %v1189 = vunpack.c.l.b16 %v1148
        %v1190 = vpack.c.b16 %v1187, %v1186
        %v1191 = vpack.c.b16 %v1189, %v1188
        %v1193 = vsel %vm719, %v1190, 0
        %v1196 = vsel %vm719, %v1191, 0
        %1198 = vmatprep.subr.bf16.mxu0 0
        %1199 = vmatpush1.bf16.msra.mxu0 0
        %1200 = vmatprep.subr.bf16.mxu0 0
        %1201 = vmatpush1.bf16.msra.mxu0 0
        %1202 = vmatprep.subr.bf16.mxu0 0
        %1203 = vmatpush1.bf16.msra.mxu0 0
        %1204 = vmatprep.subr.bf16.mxu0 0
        %1205 = vmatpush1.bf16.msra.mxu0 0
        %1206 = vmatprep.subr.bf16.mxu0 0
        %1207 = vmatpush1.bf16.msra.mxu0 0
        %1208 = vmatprep.subr.bf16.mxu0 0
        %1209 = vmatpush1.bf16.msra.mxu0 0
        %1210 = vmatprep.subr.bf16.mxu0 %v1154
        %1211 = vmatpush1.bf16.msra.mxu0 %v1153
        %1212 = vmatprep.subr.bf16.mxu0 %v1150
        %1213 = vmatpush1.bf16.msra.mxu0 %v1149
        %1214 = vmatprep.subr.bf16.mxu0 0
        %1215 = vmatpush2.bf16.msra.mxu0 0
        %1216 = vmatprep.subr.bf16.mxu0 0
        %1217 = vmatpush2.bf16.msra.mxu0 0
        %1218 = vmatprep.subr.bf16.mxu0 0
        %1219 = vmatpush2.bf16.msra.mxu0 0
        %1220 = vmatprep.subr.bf16.mxu0 0
        %1221 = vmatpush2.bf16.msra.mxu0 0
        %1222 = vmatprep.subr.bf16.mxu0 0
        %1223 = vmatpush2.bf16.msra.mxu0 0
        %1224 = vmatprep.subr.bf16.mxu0 0
        %1225 = vmatpush2.bf16.msra.mxu0 0
        %1226 = vmatprep.subr.bf16.mxu0 0
        %1227 = vmatpush2.bf16.msra.mxu0 0
        %1228 = vmatprep.subr.bf16.mxu0 0
        %1229 = vmatpush2.bf16.msra.mxu0 0
        %1230 = vmatprep.mubr.bf16.mxu0 0
        %1231 = vmatmul.mubr.bf16.gmra.mxu0 %v1193
        %v1232 = vpop.f32.mrf.mxu0
        %v1233 = vadd.f32 %v1165, %v1232
        %v1234 = vpop.f32.mrf.mxu0
        %v1235 = vadd.f32 %v1165, %v1234
        %v1236 = vpop.f32.mrf.mxu0
        %v1237 = vadd.f32 %v1170, %v1236
        %v1238 = vpop.f32.mrf.mxu0
        %v1239 = vadd.f32 %v1170, %v1238
        %1240 = vmatprep.mubr.bf16.mxu0 0
        %1241 = vmatmul.mubr.bf16.gmra.mxu0 %v1196
        %v1242 = vpop.f32.mrf.mxu0
        %v1243 = vadd.f32 %v1175, %v1242
        %v1244 = vpop.f32.mrf.mxu0
        %v1245 = vadd.f32 %v1175, %v1244
        %v1246 = vpop.f32.mrf.mxu0
        %v1247 = vadd.f32 %v1180, %v1246
        %v1248 = vpop.f32.mrf.mxu0
        %v1249 = vadd.f32 %v1180, %v1248
        %1250 = vdwg.mxu0
        %1251 = vmatprep.subr.bf16.mxu0 0
        %1252 = vmatpush1.bf16.msra.mxu0 0
        %1253 = vmatprep.subr.bf16.mxu0 0
        %1254 = vmatpush1.bf16.msra.mxu0 0
        %1255 = vmatprep.subr.bf16.mxu0 0
        %1256 = vmatpush1.bf16.msra.mxu0 0
        %1257 = vmatprep.subr.bf16.mxu0 0
        %1258 = vmatpush1.bf16.msra.mxu0 0
        %1259 = vmatprep.subr.bf16.mxu0 0
        %1260 = vmatpush1.bf16.msra.mxu0 0
        %1261 = vmatprep.subr.bf16.mxu0 0
        %1262 = vmatpush1.bf16.msra.mxu0 0
        %1263 = vmatprep.subr.bf16.mxu0 %v1156
        %1264 = vmatpush1.bf16.msra.mxu0 %v1155
        %1265 = vmatprep.subr.bf16.mxu0 %v1152
        %1266 = vmatpush1.bf16.msra.mxu0 %v1151
        %1267 = vmatprep.subr.bf16.mxu0 0
        %1268 = vmatpush2.bf16.msra.mxu0 0
        %1269 = vmatprep.subr.bf16.mxu0 0
        %1270 = vmatpush2.bf16.msra.mxu0 0
        %1271 = vmatprep.subr.bf16.mxu0 0
        %1272 = vmatpush2.bf16.msra.mxu0 0
        %1273 = vmatprep.subr.bf16.mxu0 0
        %1274 = vmatpush2.bf16.msra.mxu0 0
        %1275 = vmatprep.subr.bf16.mxu0 0
        %1276 = vmatpush2.bf16.msra.mxu0 0
        %1277 = vmatprep.subr.bf16.mxu0 0
        %1278 = vmatpush2.bf16.msra.mxu0 0
        %1279 = vmatprep.subr.bf16.mxu0 0
        %1280 = vmatpush2.bf16.msra.mxu0 0
        %1281 = vmatprep.subr.bf16.mxu0 0
        %1282 = vmatpush2.bf16.msra.mxu0 0
        %1283 = vmatprep.mubr.bf16.mxu0 0
        %1284 = vmatmul.mubr.bf16.gmra.mxu0 %v1193
        %v1285 = vpop.f32.mrf.mxu0
        %v1286 = vadd.f32 %v1165, %v1285
        %v1287 = vpop.f32.mrf.mxu0
        %v1288 = vadd.f32 %v1165, %v1287
        %v1289 = vpop.f32.mrf.mxu0
        %v1290 = vadd.f32 %v1170, %v1289
        %v1291 = vpop.f32.mrf.mxu0
        %v1292 = vadd.f32 %v1170, %v1291
        %1293 = vmatprep.mubr.bf16.mxu0 0
        %1294 = vmatmul.mubr.bf16.gmra.mxu0 %v1196
        %v1295 = vpop.f32.mrf.mxu0
        %v1296 = vadd.f32 %v1175, %v1295
        %v1297 = vpop.f32.mrf.mxu0
        %v1298 = vadd.f32 %v1175, %v1297
        %v1299 = vpop.f32.mrf.mxu0
        %v1300 = vadd.f32 %v1180, %v1299
        %v1301 = vpop.f32.mrf.mxu0
        %v1302 = vadd.f32 %v1180, %v1301
        %1303 = vdwg.mxu0
        %v1304 = vmax.f32 %v1233, 0.0
        %v1305 = vmax.f32 %v1235, 0.0
        %v1306 = vmax.f32 %v1286, 0.0
        %v1307 = vmax.f32 %v1288, 0.0
        %v1308 = vmax.f32 %v1237, 0.0
        %v1309 = vmax.f32 %v1239, 0.0
        %v1310 = vmax.f32 %v1290, 0.0
        %v1311 = vmax.f32 %v1292, 0.0
        %v1312 = vmax.f32 %v1243, 0.0
        %v1313 = vmax.f32 %v1245, 0.0
        %v1314 = vmax.f32 %v1296, 0.0
        %v1315 = vmax.f32 %v1298, 0.0
        %v1316 = vmax.f32 %v1247, 0.0
        %v1317 = vmax.f32 %v1249, 0.0
        %v1318 = vmax.f32 %v1300, 0.0
        %v1319 = vmax.f32 %v1302, 0.0
        %s1320 = scalar_lea.vmem %s5, 8
        %v1321 = vld [vmem:[%s1320] sm:$0xf]
        %v1322 = vld [vmem:[%s1320 + $0x4] sm:$0xf]
        %v1323 = vpack.c.bf16 %v1308, %v1304
        %v1324 = vpack.c.bf16 %v1309, %v1305
        %v1325 = vpack.c.bf16 %v1310, %v1306
        %v1326 = vpack.c.bf16 %v1311, %v1307
        %v1327 = vpack.c.bf16 %v1316, %v1312
        %v1328 = vpack.c.bf16 %v1317, %v1313
        %v1329 = vpack.c.bf16 %v1318, %v1314
        %v1330 = vpack.c.bf16 %v1319, %v1315
        %s1331 = scalar_lea.vmem %s7, 16
        %v1332 = vld [vmem:[%s1331] sm:$0xff]
        %v1333 = vld [vmem:[%s1331 + $0x8] sm:$0xff]
        %1335 = vset.pattern.permute.xlu0 0
        %1336 = vperm.xlu0 %1335, %v1332
        %v1337 = vpop.permute.xlu0 %1336
        %1340 = vset.pattern.permute.xlu0 0
        %1341 = vperm.xlu0 %1340, %v1333
        %v1342 = vpop.permute.xlu0 %1341
        %v1346 = vunpack.c.l.b16 %v1321
        %v1347 = vunpack.c.l.b16 %v1322
        %v1348 = vpack.c.b16 %v1347, %v1346
        %v1350 = vsel %vm719, %v1348, 0
        %1352 = vmatprep.subr.bf16.mxu0 0
        %1353 = vmatpush1.bf16.msra.mxu0 0
        %1354 = vmatprep.subr.bf16.mxu0 0
        %1355 = vmatpush1.bf16.msra.mxu0 0
        %1356 = vmatprep.subr.bf16.mxu0 0
        %1357 = vmatpush1.bf16.msra.mxu0 0
        %1358 = vmatprep.subr.bf16.mxu0 0
        %1359 = vmatpush1.bf16.msra.mxu0 0
        %1360 = vmatprep.subr.bf16.mxu0 0
        %1361 = vmatpush1.bf16.msra.mxu0 0
        %1362 = vmatprep.subr.bf16.mxu0 0
        %1363 = vmatpush1.bf16.msra.mxu0 0
        %1364 = vmatprep.subr.bf16.mxu0 %v1328
        %1365 = vmatpush1.bf16.msra.mxu0 %v1327
        %1366 = vmatprep.subr.bf16.mxu0 %v1324
        %1367 = vmatpush1.bf16.msra.mxu0 %v1323
        %1368 = vmatprep.subr.bf16.mxu0 0
        %1369 = vmatpush2.bf16.msra.mxu0 0
        %1370 = vmatprep.subr.bf16.mxu0 0
        %1371 = vmatpush2.bf16.msra.mxu0 0
        %1372 = vmatprep.subr.bf16.mxu0 0
        %1373 = vmatpush2.bf16.msra.mxu0 0
        %1374 = vmatprep.subr.bf16.mxu0 0
        %1375 = vmatpush2.bf16.msra.mxu0 0
        %1376 = vmatprep.subr.bf16.mxu0 0
        %1377 = vmatpush2.bf16.msra.mxu0 0
        %1378 = vmatprep.subr.bf16.mxu0 0
        %1379 = vmatpush2.bf16.msra.mxu0 0
        %1380 = vmatprep.subr.bf16.mxu0 0
        %1381 = vmatpush2.bf16.msra.mxu0 0
        %1382 = vmatprep.subr.bf16.mxu0 0
        %1383 = vmatpush2.bf16.msra.mxu0 0
        %1384 = vmatprep.mubr.bf16.mxu0 0
        %1385 = vmatmul.mubr.bf16.gmra.mxu0 %v1350
        %v1386 = vpop.f32.mrf.mxu0
        %v1387 = vadd.f32 %v1337, %v1386
        %v1388 = vpop.f32.mrf.mxu0
        %v1389 = vadd.f32 %v1337, %v1388
        %v1390 = vpop.f32.mrf.mxu0
        %v1391 = vadd.f32 %v1342, %v1390
        %v1392 = vpop.f32.mrf.mxu0
        %v1393 = vadd.f32 %v1342, %v1392
        %1394 = vdwg.mxu0
        %1395 = vmatprep.subr.bf16.mxu0 0
        %1396 = vmatpush1.bf16.msra.mxu0 0
        %1397 = vmatprep.subr.bf16.mxu0 0
        %1398 = vmatpush1.bf16.msra.mxu0 0
        %1399 = vmatprep.subr.bf16.mxu0 0
        %1400 = vmatpush1.bf16.msra.mxu0 0
        %1401 = vmatprep.subr.bf16.mxu0 0
        %1402 = vmatpush1.bf16.msra.mxu0 0
        %1403 = vmatprep.subr.bf16.mxu0 0
        %1404 = vmatpush1.bf16.msra.mxu0 0
        %1405 = vmatprep.subr.bf16.mxu0 0
        %1406 = vmatpush1.bf16.msra.mxu0 0
        %1407 = vmatprep.subr.bf16.mxu0 %v1330
        %1408 = vmatpush1.bf16.msra.mxu0 %v1329
        %1409 = vmatprep.subr.bf16.mxu0 %v1326
        %1410 = vmatpush1.bf16.msra.mxu0 %v1325
        %1411 = vmatprep.subr.bf16.mxu0 0
        %1412 = vmatpush2.bf16.msra.mxu0 0
        %1413 = vmatprep.subr.bf16.mxu0 0
        %1414 = vmatpush2.bf16.msra.mxu0 0
        %1415 = vmatprep.subr.bf16.mxu0 0
        %1416 = vmatpush2.bf16.msra.mxu0 0
        %1417 = vmatprep.subr.bf16.mxu0 0
        %1418 = vmatpush2.bf16.msra.mxu0 0
        %1419 = vmatprep.subr.bf16.mxu0 0
        %1420 = vmatpush2.bf16.msra.mxu0 0
        %1421 = vmatprep.subr.bf16.mxu0 0
        %1422 = vmatpush2.bf16.msra.mxu0 0
        %1423 = vmatprep.subr.bf16.mxu0 0
        %1424 = vmatpush2.bf16.msra.mxu0 0
        %1425 = vmatprep.subr.bf16.mxu0 0
        %1426 = vmatpush2.bf16.msra.mxu0 0
        %1427 = vmatprep.mubr.bf16.mxu0 0
        %1428 = vmatmul.mubr.bf16.gmra.mxu0 %v1350
        %v1429 = vpop.f32.mrf.mxu0
        %v1430 = vadd.f32 %v1337, %v1429
        %v1431 = vpop.f32.mrf.mxu0
        %v1432 = vadd.f32 %v1337, %v1431
        %v1433 = vpop.f32.mrf.mxu0
        %v1434 = vadd.f32 %v1342, %v1433
        %v1435 = vpop.f32.mrf.mxu0
        %v1436 = vadd.f32 %v1342, %v1435
        %1437 = vdwg.mxu0
        %v1438 = vadd.f32 %v964, %v1387
        %v1439 = vadd.f32 %v965, %v1389
        %v1440 = vadd.f32 %v966, %v1430
        %v1441 = vadd.f32 %v967, %v1432
        %v1442 = vadd.f32 %v968, %v1391
        %v1443 = vadd.f32 %v969, %v1393
        %v1444 = vadd.f32 %v970, %v1434
        %v1445 = vadd.f32 %v971, %v1436
        %s1446 = scalar_lea.vmem %s3, 32
        %v1447 = vld [vmem:[%s1446] sm:$0xf]
        %v1448 = vld [vmem:[%s1446 + $0x4] sm:$0xf]
        %v1449 = vld [vmem:[%s1446 + $0x8] sm:$0xf]
        %v1450 = vld [vmem:[%s1446 + $0xc] sm:$0xf]
        %v1451 = vpack.c.bf16 %v1442, %v1438
        %v1452 = vpack.c.bf16 %v1443, %v1439
        %v1453 = vpack.c.bf16 %v1444, %v1440
        %v1454 = vpack.c.bf16 %v1445, %v1441
        %s1455 = scalar_lea.vmem %s6, 128
        %v1456 = vld [vmem:[%s1455] sm:$0xff]
        %v1457 = vld [vmem:[%s1455 + $0x8] sm:$0xff]
        %v1458 = vld [vmem:[%s1455 + $0x10] sm:$0xff]
        %v1459 = vld [vmem:[%s1455 + $0x18] sm:$0xff]
        %1461 = vset.pattern.permute.xlu0 0
        %1462 = vperm.xlu0 %1461, %v1456
        %v1463 = vpop.permute.xlu0 %1462
        %1466 = vset.pattern.permute.xlu0 0
        %1467 = vperm.xlu0 %1466, %v1457
        %v1468 = vpop.permute.xlu0 %1467
        %1471 = vset.pattern.permute.xlu0 0
        %1472 = vperm.xlu0 %1471, %v1458
        %v1473 = vpop.permute.xlu0 %1472
        %1476 = vset.pattern.permute.xlu0 0
        %1477 = vperm.xlu0 %1476, %v1459
        %v1478 = vpop.permute.xlu0 %1477
        %v1484 = vunpack.c.l.b16 %v1447
        %v1485 = vunpack.c.l.b16 %v1448
        %v1486 = vunpack.c.l.b16 %v1449
        %v1487 = vunpack.c.l.b16 %v1450
        %v1488 = vpack.c.b16 %v1485, %v1484
        %v1489 = vpack.c.b16 %v1487, %v1486
        %v1491 = vsel %vm543, %v1488, 0
        %v1494 = vsel %vm543, %v1489, 0
        %1496 = vmatprep.subr.bf16.mxu0 0
        %1497 = vmatpush1.bf16.msra.mxu0 0
        %1498 = vmatprep.subr.bf16.mxu0 0
        %1499 = vmatpush1.bf16.msra.mxu0 0
        %1500 = vmatprep.subr.bf16.mxu0 0
        %1501 = vmatpush1.bf16.msra.mxu0 0
        %1502 = vmatprep.subr.bf16.mxu0 0
        %1503 = vmatpush1.bf16.msra.mxu0 0
        %1504 = vmatprep.subr.bf16.mxu0 0
        %1505 = vmatpush1.bf16.msra.mxu0 0
        %1506 = vmatprep.subr.bf16.mxu0 0
        %1507 = vmatpush1.bf16.msra.mxu0 0
        %1508 = vmatprep.subr.bf16.mxu0 0
        %1509 = vmatpush1.bf16.msra.mxu0 0
        %1510 = vmatprep.subr.bf16.mxu0 %v1452
        %1511 = vmatpush1.bf16.msra.mxu0 %v1451
        %1512 = vmatprep.subr.bf16.mxu0 0
        %1513 = vmatpush2.bf16.msra.mxu0 0
        %1514 = vmatprep.subr.bf16.mxu0 0
        %1515 = vmatpush2.bf16.msra.mxu0 0
        %1516 = vmatprep.subr.bf16.mxu0 0
        %1517 = vmatpush2.bf16.msra.mxu0 0
        %1518 = vmatprep.subr.bf16.mxu0 0
        %1519 = vmatpush2.bf16.msra.mxu0 0
        %1520 = vmatprep.subr.bf16.mxu0 0
        %1521 = vmatpush2.bf16.msra.mxu0 0
        %1522 = vmatprep.subr.bf16.mxu0 0
        %1523 = vmatpush2.bf16.msra.mxu0 0
        %1524 = vmatprep.subr.bf16.mxu0 0
        %1525 = vmatpush2.bf16.msra.mxu0 0
        %1526 = vmatprep.subr.bf16.mxu0 0
        %1527 = vmatpush2.bf16.msra.mxu0 0
        %1528 = vmatprep.mubr.bf16.mxu0 0
        %1529 = vmatmul.mubr.bf16.gmra.mxu0 %v1491
        %v1530 = vpop.f32.mrf.mxu0
        %v1531 = vadd.f32 %v1463, %v1530
        %v1532 = vpop.f32.mrf.mxu0
        %v1533 = vadd.f32 %v1463, %v1532
        %v1534 = vpop.f32.mrf.mxu0
        %v1535 = vadd.f32 %v1468, %v1534
        %v1536 = vpop.f32.mrf.mxu0
        %v1537 = vadd.f32 %v1468, %v1536
        %1538 = vmatprep.mubr.bf16.mxu0 0
        %1539 = vmatmul.mubr.bf16.gmra.mxu0 %v1494
        %v1540 = vpop.f32.mrf.mxu0
        %v1541 = vadd.f32 %v1473, %v1540
        %v1542 = vpop.f32.mrf.mxu0
        %v1543 = vadd.f32 %v1473, %v1542
        %v1544 = vpop.f32.mrf.mxu0
        %v1545 = vadd.f32 %v1478, %v1544
        %v1546 = vpop.f32.mrf.mxu0
        %v1547 = vadd.f32 %v1478, %v1546
        %1548 = vdwg.mxu0
        %1549 = vmatprep.subr.bf16.mxu0 0
        %1550 = vmatpush1.bf16.msra.mxu0 0
        %1551 = vmatprep.subr.bf16.mxu0 0
        %1552 = vmatpush1.bf16.msra.mxu0 0
        %1553 = vmatprep.subr.bf16.mxu0 0
        %1554 = vmatpush1.bf16.msra.mxu0 0
        %1555 = vmatprep.subr.bf16.mxu0 0
        %1556 = vmatpush1.bf16.msra.mxu0 0
        %1557 = vmatprep.subr.bf16.mxu0 0
        %1558 = vmatpush1.bf16.msra.mxu0 0
        %1559 = vmatprep.subr.bf16.mxu0 0
        %1560 = vmatpush1.bf16.msra.mxu0 0
        %1561 = vmatprep.subr.bf16.mxu0 0
        %1562 = vmatpush1.bf16.msra.mxu0 0
        %1563 = vmatprep.subr.bf16.mxu0 %v1454
        %1564 = vmatpush1.bf16.msra.mxu0 %v1453
        %1565 = vmatprep.subr.bf16.mxu0 0
        %1566 = vmatpush2.bf16.msra.mxu0 0
        %1567 = vmatprep.subr.bf16.mxu0 0
        %1568 = vmatpush2.bf16.msra.mxu0 0
        %1569 = vmatprep.subr.bf16.mxu0 0
        %1570 = vmatpush2.bf16.msra.mxu0 0
        %1571 = vmatprep.subr.bf16.mxu0 0
        %1572 = vmatpush2.bf16.msra.mxu0 0
        %1573 = vmatprep.subr.bf16.mxu0 0
        %1574 = vmatpush2.bf16.msra.mxu0 0
        %1575 = vmatprep.subr.bf16.mxu0 0
        %1576 = vmatpush2.bf16.msra.mxu0 0
        %1577 = vmatprep.subr.bf16.mxu0 0
        %1578 = vmatpush2.bf16.msra.mxu0 0
        %1579 = vmatprep.subr.bf16.mxu0 0
        %1580 = vmatpush2.bf16.msra.mxu0 0
        %1581 = vmatprep.mubr.bf16.mxu0 0
        %1582 = vmatmul.mubr.bf16.gmra.mxu0 %v1491
        %v1583 = vpop.f32.mrf.mxu0
        %v1584 = vadd.f32 %v1463, %v1583
        %v1585 = vpop.f32.mrf.mxu0
        %v1586 = vadd.f32 %v1463, %v1585
        %v1587 = vpop.f32.mrf.mxu0
        %v1588 = vadd.f32 %v1468, %v1587
        %v1589 = vpop.f32.mrf.mxu0
        %v1590 = vadd.f32 %v1468, %v1589
        %1591 = vmatprep.mubr.bf16.mxu0 0
        %1592 = vmatmul.mubr.bf16.gmra.mxu0 %v1494
        %v1593 = vpop.f32.mrf.mxu0
        %v1594 = vadd.f32 %v1473, %v1593
        %v1595 = vpop.f32.mrf.mxu0
        %v1596 = vadd.f32 %v1473, %v1595
        %v1597 = vpop.f32.mrf.mxu0
        %v1598 = vadd.f32 %v1478, %v1597
        %v1599 = vpop.f32.mrf.mxu0
        %v1600 = vadd.f32 %v1478, %v1599
        %1601 = vdwg.mxu0
        %v1602 = vmax.f32 %v1531, 0.0
        %v1603 = vmax.f32 %v1533, 0.0
        %v1604 = vmax.f32 %v1584, 0.0
        %v1605 = vmax.f32 %v1586, 0.0
        %v1606 = vmax.f32 %v1535, 0.0
        %v1607 = vmax.f32 %v1537, 0.0
        %v1608 = vmax.f32 %v1588, 0.0
        %v1609 = vmax.f32 %v1590, 0.0
        %v1610 = vmax.f32 %v1541, 0.0
        %v1611 = vmax.f32 %v1543, 0.0
        %v1612 = vmax.f32 %v1594, 0.0
        %v1613 = vmax.f32 %v1596, 0.0
        %v1614 = vmax.f32 %v1545, 0.0
        %v1615 = vmax.f32 %v1547, 0.0
        %v1616 = vmax.f32 %v1598, 0.0
        %v1617 = vmax.f32 %v1600, 0.0
        %s1618 = scalar_lea.vmem %s4, 32
        %v1619 = vld [vmem:[%s1618] sm:$0xf]
        %v1620 = vld [vmem:[%s1618 + $0x4] sm:$0xf]
        %v1621 = vld [vmem:[%s1618 + $0x8] sm:$0xf]
        %v1622 = vld [vmem:[%s1618 + $0xc] sm:$0xf]
        %v1623 = vpack.c.bf16 %v1606, %v1602
        %v1624 = vpack.c.bf16 %v1607, %v1603
        %v1625 = vpack.c.bf16 %v1608, %v1604
        %v1626 = vpack.c.bf16 %v1609, %v1605
        %v1627 = vpack.c.bf16 %v1614, %v1610
        %v1628 = vpack.c.bf16 %v1615, %v1611
        %v1629 = vpack.c.bf16 %v1616, %v1612
        %v1630 = vpack.c.bf16 %v1617, %v1613
        %s1631 = scalar_lea.vmem %s6, 160
        %v1632 = vld [vmem:[%s1631] sm:$0xff]
        %v1633 = vld [vmem:[%s1631 + $0x8] sm:$0xff]
        %v1634 = vld [vmem:[%s1631 + $0x10] sm:$0xff]
        %v1635 = vld [vmem:[%s1631 + $0x18] sm:$0xff]
        %1637 = vset.pattern.permute.xlu0 0
        %1638 = vperm.xlu0 %1637, %v1632
        %v1639 = vpop.permute.xlu0 %1638
        %1642 = vset.pattern.permute.xlu0 0
        %1643 = vperm.xlu0 %1642, %v1633
        %v1644 = vpop.permute.xlu0 %1643
        %1647 = vset.pattern.permute.xlu0 0
        %1648 = vperm.xlu0 %1647, %v1634
        %v1649 = vpop.permute.xlu0 %1648
        %1652 = vset.pattern.permute.xlu0 0
        %1653 = vperm.xlu0 %1652, %v1635
        %v1654 = vpop.permute.xlu0 %1653
        %v1660 = vunpack.c.l.b16 %v1619
        %v1661 = vunpack.c.l.b16 %v1620
        %v1662 = vunpack.c.l.b16 %v1621
        %v1663 = vunpack.c.l.b16 %v1622
        %v1664 = vpack.c.b16 %v1661, %v1660
        %v1665 = vpack.c.b16 %v1663, %v1662
        %v1667 = vsel %vm719, %v1664, 0
        %v1670 = vsel %vm719, %v1665, 0
        %1672 = vmatprep.subr.bf16.mxu0 0
        %1673 = vmatpush1.bf16.msra.mxu0 0
        %1674 = vmatprep.subr.bf16.mxu0 0
        %1675 = vmatpush1.bf16.msra.mxu0 0
        %1676 = vmatprep.subr.bf16.mxu0 0
        %1677 = vmatpush1.bf16.msra.mxu0 0
        %1678 = vmatprep.subr.bf16.mxu0 0
        %1679 = vmatpush1.bf16.msra.mxu0 0
        %1680 = vmatprep.subr.bf16.mxu0 0
        %1681 = vmatpush1.bf16.msra.mxu0 0
        %1682 = vmatprep.subr.bf16.mxu0 0
        %1683 = vmatpush1.bf16.msra.mxu0 0
        %1684 = vmatprep.subr.bf16.mxu0 %v1628
        %1685 = vmatpush1.bf16.msra.mxu0 %v1627
        %1686 = vmatprep.subr.bf16.mxu0 %v1624
        %1687 = vmatpush1.bf16.msra.mxu0 %v1623
        %1688 = vmatprep.subr.bf16.mxu0 0
        %1689 = vmatpush2.bf16.msra.mxu0 0
        %1690 = vmatprep.subr.bf16.mxu0 0
        %1691 = vmatpush2.bf16.msra.mxu0 0
        %1692 = vmatprep.subr.bf16.mxu0 0
        %1693 = vmatpush2.bf16.msra.mxu0 0
        %1694 = vmatprep.subr.bf16.mxu0 0
        %1695 = vmatpush2.bf16.msra.mxu0 0
        %1696 = vmatprep.subr.bf16.mxu0 0
        %1697 = vmatpush2.bf16.msra.mxu0 0
        %1698 = vmatprep.subr.bf16.mxu0 0
        %1699 = vmatpush2.bf16.msra.mxu0 0
        %1700 = vmatprep.subr.bf16.mxu0 0
        %1701 = vmatpush2.bf16.msra.mxu0 0
        %1702 = vmatprep.subr.bf16.mxu0 0
        %1703 = vmatpush2.bf16.msra.mxu0 0
        %1704 = vmatprep.mubr.bf16.mxu0 0
        %1705 = vmatmul.mubr.bf16.gmra.mxu0 %v1667
        %v1706 = vpop.f32.mrf.mxu0
        %v1707 = vadd.f32 %v1639, %v1706
        %v1708 = vpop.f32.mrf.mxu0
        %v1709 = vadd.f32 %v1639, %v1708
        %v1710 = vpop.f32.mrf.mxu0
        %v1711 = vadd.f32 %v1644, %v1710
        %v1712 = vpop.f32.mrf.mxu0
        %v1713 = vadd.f32 %v1644, %v1712
        %1714 = vmatprep.mubr.bf16.mxu0 0
        %1715 = vmatmul.mubr.bf16.gmra.mxu0 %v1670
        %v1716 = vpop.f32.mrf.mxu0
        %v1717 = vadd.f32 %v1649, %v1716
        %v1718 = vpop.f32.mrf.mxu0
        %v1719 = vadd.f32 %v1649, %v1718
        %v1720 = vpop.f32.mrf.mxu0
        %v1721 = vadd.f32 %v1654, %v1720
        %v1722 = vpop.f32.mrf.mxu0
        %v1723 = vadd.f32 %v1654, %v1722
        %1724 = vdwg.mxu0
        %1725 = vmatprep.subr.bf16.mxu0 0
        %1726 = vmatpush1.bf16.msra.mxu0 0
        %1727 = vmatprep.subr.bf16.mxu0 0
        %1728 = vmatpush1.bf16.msra.mxu0 0
        %1729 = vmatprep.subr.bf16.mxu0 0
        %1730 = vmatpush1.bf16.msra.mxu0 0
        %1731 = vmatprep.subr.bf16.mxu0 0
        %1732 = vmatpush1.bf16.msra.mxu0 0
        %1733 = vmatprep.subr.bf16.mxu0 0
        %1734 = vmatpush1.bf16.msra.mxu0 0
        %1735 = vmatprep.subr.bf16.mxu0 0
        %1736 = vmatpush1.bf16.msra.mxu0 0
        %1737 = vmatprep.subr.bf16.mxu0 %v1630
        %1738 = vmatpush1.bf16.msra.mxu0 %v1629
        %1739 = vmatprep.subr.bf16.mxu0 %v1626
        %1740 = vmatpush1.bf16.msra.mxu0 %v1625
        %1741 = vmatprep.subr.bf16.mxu0 0
        %1742 = vmatpush2.bf16.msra.mxu0 0
        %1743 = vmatprep.subr.bf16.mxu0 0
        %1744 = vmatpush2.bf16.msra.mxu0 0
        %1745 = vmatprep.subr.bf16.mxu0 0
        %1746 = vmatpush2.bf16.msra.mxu0 0
        %1747 = vmatprep.subr.bf16.mxu0 0
        %1748 = vmatpush2.bf16.msra.mxu0 0
        %1749 = vmatprep.subr.bf16.mxu0 0
        %1750 = vmatpush2.bf16.msra.mxu0 0
        %1751 = vmatprep.subr.bf16.mxu0 0
        %1752 = vmatpush2.bf16.msra.mxu0 0
        %1753 = vmatprep.subr.bf16.mxu0 0
        %1754 = vmatpush2.bf16.msra.mxu0 0
        %1755 = vmatprep.subr.bf16.mxu0 0
        %1756 = vmatpush2.bf16.msra.mxu0 0
        %1757 = vmatprep.mubr.bf16.mxu0 0
        %1758 = vmatmul.mubr.bf16.gmra.mxu0 %v1667
        %v1759 = vpop.f32.mrf.mxu0
        %v1760 = vadd.f32 %v1639, %v1759
        %v1761 = vpop.f32.mrf.mxu0
        %v1762 = vadd.f32 %v1639, %v1761
        %v1763 = vpop.f32.mrf.mxu0
        %v1764 = vadd.f32 %v1644, %v1763
        %v1765 = vpop.f32.mrf.mxu0
        %v1766 = vadd.f32 %v1644, %v1765
        %1767 = vmatprep.mubr.bf16.mxu0 0
        %1768 = vmatmul.mubr.bf16.gmra.mxu0 %v1670
        %v1769 = vpop.f32.mrf.mxu0
        %v1770 = vadd.f32 %v1649, %v1769
        %v1771 = vpop.f32.mrf.mxu0
        %v1772 = vadd.f32 %v1649, %v1771
        %v1773 = vpop.f32.mrf.mxu0
        %v1774 = vadd.f32 %v1654, %v1773
        %v1775 = vpop.f32.mrf.mxu0
        %v1776 = vadd.f32 %v1654, %v1775
        %1777 = vdwg.mxu0
        %v1778 = vmax.f32 %v1707, 0.0
        %v1779 = vmax.f32 %v1709, 0.0
        %v1780 = vmax.f32 %v1760, 0.0
        %v1781 = vmax.f32 %v1762, 0.0
        %v1782 = vmax.f32 %v1711, 0.0
        %v1783 = vmax.f32 %v1713, 0.0
        %v1784 = vmax.f32 %v1764, 0.0
        %v1785 = vmax.f32 %v1766, 0.0
        %v1786 = vmax.f32 %v1717, 0.0
        %v1787 = vmax.f32 %v1719, 0.0
        %v1788 = vmax.f32 %v1770, 0.0
        %v1789 = vmax.f32 %v1772, 0.0
        %v1790 = vmax.f32 %v1721, 0.0
        %v1791 = vmax.f32 %v1723, 0.0
        %v1792 = vmax.f32 %v1774, 0.0
        %v1793 = vmax.f32 %v1776, 0.0
        %s1794 = scalar_lea.vmem %s5, 16
        %v1795 = vld [vmem:[%s1794] sm:$0xf]
        %v1796 = vld [vmem:[%s1794 + $0x4] sm:$0xf]
        %v1797 = vpack.c.bf16 %v1782, %v1778
        %v1798 = vpack.c.bf16 %v1783, %v1779
        %v1799 = vpack.c.bf16 %v1784, %v1780
        %v1800 = vpack.c.bf16 %v1785, %v1781
        %v1801 = vpack.c.bf16 %v1790, %v1786
        %v1802 = vpack.c.bf16 %v1791, %v1787
        %v1803 = vpack.c.bf16 %v1792, %v1788
        %v1804 = vpack.c.bf16 %v1793, %v1789
        %s1805 = scalar_lea.vmem %s7, 32
        %v1806 = vld [vmem:[%s1805] sm:$0xff]
        %v1807 = vld [vmem:[%s1805 + $0x8] sm:$0xff]
        %1809 = vset.pattern.permute.xlu0 0
        %1810 = vperm.xlu0 %1809, %v1806
        %v1811 = vpop.permute.xlu0 %1810
        %1814 = vset.pattern.permute.xlu0 0
        %1815 = vperm.xlu0 %1814, %v1807
        %v1816 = vpop.permute.xlu0 %1815
        %v1820 = vunpack.c.l.b16 %v1795
        %v1821 = vunpack.c.l.b16 %v1796
        %v1822 = vpack.c.b16 %v1821, %v1820
        %v1824 = vsel %vm719, %v1822, 0
        %1826 = vmatprep.subr.bf16.mxu0 0
        %1827 = vmatpush1.bf16.msra.mxu0 0
        %1828 = vmatprep.subr.bf16.mxu0 0
        %1829 = vmatpush1.bf16.msra.mxu0 0
        %1830 = vmatprep.subr.bf16.mxu0 0
        %1831 = vmatpush1.bf16.msra.mxu0 0
        %1832 = vmatprep.subr.bf16.mxu0 0
        %1833 = vmatpush1.bf16.msra.mxu0 0
        %1834 = vmatprep.subr.bf16.mxu0 0
        %1835 = vmatpush1.bf16.msra.mxu0 0
        %1836 = vmatprep.subr.bf16.mxu0 0
        %1837 = vmatpush1.bf16.msra.mxu0 0
        %1838 = vmatprep.subr.bf16.mxu0 %v1802
        %1839 = vmatpush1.bf16.msra.mxu0 %v1801
        %1840 = vmatprep.subr.bf16.mxu0 %v1798
        %1841 = vmatpush1.bf16.msra.mxu0 %v1797
        %1842 = vmatprep.subr.bf16.mxu0 0
        %1843 = vmatpush2.bf16.msra.mxu0 0
        %1844 = vmatprep.subr.bf16.mxu0 0
        %1845 = vmatpush2.bf16.msra.mxu0 0
        %1846 = vmatprep.subr.bf16.mxu0 0
        %1847 = vmatpush2.bf16.msra.mxu0 0
        %1848 = vmatprep.subr.bf16.mxu0 0
        %1849 = vmatpush2.bf16.msra.mxu0 0
        %1850 = vmatprep.subr.bf16.mxu0 0
        %1851 = vmatpush2.bf16.msra.mxu0 0
        %1852 = vmatprep.subr.bf16.mxu0 0
        %1853 = vmatpush2.bf16.msra.mxu0 0
        %1854 = vmatprep.subr.bf16.mxu0 0
        %1855 = vmatpush2.bf16.msra.mxu0 0
        %1856 = vmatprep.subr.bf16.mxu0 0
        %1857 = vmatpush2.bf16.msra.mxu0 0
        %1858 = vmatprep.mubr.bf16.mxu0 0
        %1859 = vmatmul.mubr.bf16.gmra.mxu0 %v1824
        %v1860 = vpop.f32.mrf.mxu0
        %v1861 = vadd.f32 %v1811, %v1860
        %v1862 = vpop.f32.mrf.mxu0
        %v1863 = vadd.f32 %v1811, %v1862
        %v1864 = vpop.f32.mrf.mxu0
        %v1865 = vadd.f32 %v1816, %v1864
        %v1866 = vpop.f32.mrf.mxu0
        %v1867 = vadd.f32 %v1816, %v1866
        %1868 = vdwg.mxu0
        %1869 = vmatprep.subr.bf16.mxu0 0
        %1870 = vmatpush1.bf16.msra.mxu0 0
        %1871 = vmatprep.subr.bf16.mxu0 0
        %1872 = vmatpush1.bf16.msra.mxu0 0
        %1873 = vmatprep.subr.bf16.mxu0 0
        %1874 = vmatpush1.bf16.msra.mxu0 0
        %1875 = vmatprep.subr.bf16.mxu0 0
        %1876 = vmatpush1.bf16.msra.mxu0 0
        %1877 = vmatprep.subr.bf16.mxu0 0
        %1878 = vmatpush1.bf16.msra.mxu0 0
        %1879 = vmatprep.subr.bf16.mxu0 0
        %1880 = vmatpush1.bf16.msra.mxu0 0
        %1881 = vmatprep.subr.bf16.mxu0 %v1804
        %1882 = vmatpush1.bf16.msra.mxu0 %v1803
        %1883 = vmatprep.subr.bf16.mxu0 %v1800
        %1884 = vmatpush1.bf16.msra.mxu0 %v1799
        %1885 = vmatprep.subr.bf16.mxu0 0
        %1886 = vmatpush2.bf16.msra.mxu0 0
        %1887 = vmatprep.subr.bf16.mxu0 0
        %1888 = vmatpush2.bf16.msra.mxu0 0
        %1889 = vmatprep.subr.bf16.mxu0 0
        %1890 = vmatpush2.bf16.msra.mxu0 0
        %1891 = vmatprep.subr.bf16.mxu0 0
        %1892 = vmatpush2.bf16.msra.mxu0 0
        %1893 = vmatprep.subr.bf16.mxu0 0
        %1894 = vmatpush2.bf16.msra.mxu0 0
        %1895 = vmatprep.subr.bf16.mxu0 0
        %1896 = vmatpush2.bf16.msra.mxu0 0
        %1897 = vmatprep.subr.bf16.mxu0 0
        %1898 = vmatpush2.bf16.msra.mxu0 0
        %1899 = vmatprep.subr.bf16.mxu0 0
        %1900 = vmatpush2.bf16.msra.mxu0 0
        %1901 = vmatprep.mubr.bf16.mxu0 0
        %1902 = vmatmul.mubr.bf16.gmra.mxu0 %v1824
        %v1903 = vpop.f32.mrf.mxu0
        %v1904 = vadd.f32 %v1811, %v1903
        %v1905 = vpop.f32.mrf.mxu0
        %v1906 = vadd.f32 %v1811, %v1905
        %v1907 = vpop.f32.mrf.mxu0
        %v1908 = vadd.f32 %v1816, %v1907
        %v1909 = vpop.f32.mrf.mxu0
        %v1910 = vadd.f32 %v1816, %v1909
        %1911 = vdwg.mxu0
        %v1912 = vadd.f32 %v1438, %v1861
        %v1913 = vadd.f32 %v1439, %v1863
        %v1914 = vadd.f32 %v1440, %v1904
        %v1915 = vadd.f32 %v1441, %v1906
        %v1916 = vadd.f32 %v1442, %v1865
        %v1917 = vadd.f32 %v1443, %v1867
        %v1918 = vadd.f32 %v1444, %v1908
        %v1919 = vadd.f32 %v1445, %v1910
        %s1920 = scalar_lea.vmem %s3, 48
        %v1921 = vld [vmem:[%s1920] sm:$0xf]
        %v1922 = vld [vmem:[%s1920 + $0x4] sm:$0xf]
        %v1923 = vld [vmem:[%s1920 + $0x8] sm:$0xf]
        %v1924 = vld [vmem:[%s1920 + $0xc] sm:$0xf]
        %v1925 = vpack.c.bf16 %v1916, %v1912
        %v1926 = vpack.c.bf16 %v1917, %v1913
        %v1927 = vpack.c.bf16 %v1918, %v1914
        %v1928 = vpack.c.bf16 %v1919, %v1915
        %s1929 = scalar_lea.vmem %s6, 192
        %v1930 = vld [vmem:[%s1929] sm:$0xff]
        %v1931 = vld [vmem:[%s1929 + $0x8] sm:$0xff]
        %v1932 = vld [vmem:[%s1929 + $0x10] sm:$0xff]
        %v1933 = vld [vmem:[%s1929 + $0x18] sm:$0xff]
        %1935 = vset.pattern.permute.xlu0 0
        %1936 = vperm.xlu0 %1935, %v1930
        %v1937 = vpop.permute.xlu0 %1936
        %1940 = vset.pattern.permute.xlu0 0
        %1941 = vperm.xlu0 %1940, %v1931
        %v1942 = vpop.permute.xlu0 %1941
        %1945 = vset.pattern.permute.xlu0 0
        %1946 = vperm.xlu0 %1945, %v1932
        %v1947 = vpop.permute.xlu0 %1946
        %1950 = vset.pattern.permute.xlu0 0
        %1951 = vperm.xlu0 %1950, %v1933
        %v1952 = vpop.permute.xlu0 %1951
        %v1958 = vunpack.c.l.b16 %v1921
        %v1959 = vunpack.c.l.b16 %v1922
        %v1960 = vunpack.c.l.b16 %v1923
        %v1961 = vunpack.c.l.b16 %v1924
        %v1962 = vpack.c.b16 %v1959, %v1958
        %v1963 = vpack.c.b16 %v1961, %v1960
        %v1965 = vsel %vm543, %v1962, 0
        %v1968 = vsel %vm543, %v1963, 0
        %1970 = vmatprep.subr.bf16.mxu0 0
        %1971 = vmatpush1.bf16.msra.mxu0 0
        %1972 = vmatprep.subr.bf16.mxu0 0
        %1973 = vmatpush1.bf16.msra.mxu0 0
        %1974 = vmatprep.subr.bf16.mxu0 0
        %1975 = vmatpush1.bf16.msra.mxu0 0
        %1976 = vmatprep.subr.bf16.mxu0 0
        %1977 = vmatpush1.bf16.msra.mxu0 0
        %1978 = vmatprep.subr.bf16.mxu0 0
        %1979 = vmatpush1.bf16.msra.mxu0 0
        %1980 = vmatprep.subr.bf16.mxu0 0
        %1981 = vmatpush1.bf16.msra.mxu0 0
        %1982 = vmatprep.subr.bf16.mxu0 0
        %1983 = vmatpush1.bf16.msra.mxu0 0
        %1984 = vmatprep.subr.bf16.mxu0 %v1926
        %1985 = vmatpush1.bf16.msra.mxu0 %v1925
        %1986 = vmatprep.subr.bf16.mxu0 0
        %1987 = vmatpush2.bf16.msra.mxu0 0
        %1988 = vmatprep.subr.bf16.mxu0 0
        %1989 = vmatpush2.bf16.msra.mxu0 0
        %1990 = vmatprep.subr.bf16.mxu0 0
        %1991 = vmatpush2.bf16.msra.mxu0 0
        %1992 = vmatprep.subr.bf16.mxu0 0
        %1993 = vmatpush2.bf16.msra.mxu0 0
        %1994 = vmatprep.subr.bf16.mxu0 0
        %1995 = vmatpush2.bf16.msra.mxu0 0
        %1996 = vmatprep.subr.bf16.mxu0 0
        %1997 = vmatpush2.bf16.msra.mxu0 0
        %1998 = vmatprep.subr.bf16.mxu0 0
        %1999 = vmatpush2.bf16.msra.mxu0 0
        %2000 = vmatprep.subr.bf16.mxu0 0
        %2001 = vmatpush2.bf16.msra.mxu0 0
        %2002 = vmatprep.mubr.bf16.mxu0 0
        %2003 = vmatmul.mubr.bf16.gmra.mxu0 %v1965
        %v2004 = vpop.f32.mrf.mxu0
        %v2005 = vadd.f32 %v1937, %v2004
        %v2006 = vpop.f32.mrf.mxu0
        %v2007 = vadd.f32 %v1937, %v2006
        %v2008 = vpop.f32.mrf.mxu0
        %v2009 = vadd.f32 %v1942, %v2008
        %v2010 = vpop.f32.mrf.mxu0
        %v2011 = vadd.f32 %v1942, %v2010
        %2012 = vmatprep.mubr.bf16.mxu0 0
        %2013 = vmatmul.mubr.bf16.gmra.mxu0 %v1968
        %v2014 = vpop.f32.mrf.mxu0
        %v2015 = vadd.f32 %v1947, %v2014
        %v2016 = vpop.f32.mrf.mxu0
        %v2017 = vadd.f32 %v1947, %v2016
        %v2018 = vpop.f32.mrf.mxu0
        %v2019 = vadd.f32 %v1952, %v2018
        %v2020 = vpop.f32.mrf.mxu0
        %v2021 = vadd.f32 %v1952, %v2020
        %2022 = vdwg.mxu0
        %2023 = vmatprep.subr.bf16.mxu0 0
        %2024 = vmatpush1.bf16.msra.mxu0 0
        %2025 = vmatprep.subr.bf16.mxu0 0
        %2026 = vmatpush1.bf16.msra.mxu0 0
        %2027 = vmatprep.subr.bf16.mxu0 0
        %2028 = vmatpush1.bf16.msra.mxu0 0
        %2029 = vmatprep.subr.bf16.mxu0 0
        %2030 = vmatpush1.bf16.msra.mxu0 0
        %2031 = vmatprep.subr.bf16.mxu0 0
        %2032 = vmatpush1.bf16.msra.mxu0 0
        %2033 = vmatprep.subr.bf16.mxu0 0
        %2034 = vmatpush1.bf16.msra.mxu0 0
        %2035 = vmatprep.subr.bf16.mxu0 0
        %2036 = vmatpush1.bf16.msra.mxu0 0
        %2037 = vmatprep.subr.bf16.mxu0 %v1928
        %2038 = vmatpush1.bf16.msra.mxu0 %v1927
        %2039 = vmatprep.subr.bf16.mxu0 0
        %2040 = vmatpush2.bf16.msra.mxu0 0
        %2041 = vmatprep.subr.bf16.mxu0 0
        %2042 = vmatpush2.bf16.msra.mxu0 0
        %2043 = vmatprep.subr.bf16.mxu0 0
        %2044 = vmatpush2.bf16.msra.mxu0 0
        %2045 = vmatprep.subr.bf16.mxu0 0
        %2046 = vmatpush2.bf16.msra.mxu0 0
        %2047 = vmatprep.subr.bf16.mxu0 0
        %2048 = vmatpush2.bf16.msra.mxu0 0
        %2049 = vmatprep.subr.bf16.mxu0 0
        %2050 = vmatpush2.bf16.msra.mxu0 0
        %2051 = vmatprep.subr.bf16.mxu0 0
        %2052 = vmatpush2.bf16.msra.mxu0 0
        %2053 = vmatprep.subr.bf16.mxu0 0
        %2054 = vmatpush2.bf16.msra.mxu0 0
        %2055 = vmatprep.mubr.bf16.mxu0 0
        %2056 = vmatmul.mubr.bf16.gmra.mxu0 %v1965
        %v2057 = vpop.f32.mrf.mxu0
        %v2058 = vadd.f32 %v1937, %v2057
        %v2059 = vpop.f32.mrf.mxu0
        %v2060 = vadd.f32 %v1937, %v2059
        %v2061 = vpop.f32.mrf.mxu0
        %v2062 = vadd.f32 %v1942, %v2061
        %v2063 = vpop.f32.mrf.mxu0
        %v2064 = vadd.f32 %v1942, %v2063
        %2065 = vmatprep.mubr.bf16.mxu0 0
        %2066 = vmatmul.mubr.bf16.gmra.mxu0 %v1968
        %v2067 = vpop.f32.mrf.mxu0
        %v2068 = vadd.f32 %v1947, %v2067
        %v2069 = vpop.f32.mrf.mxu0
        %v2070 = vadd.f32 %v1947, %v2069
        %v2071 = vpop.f32.mrf.mxu0
        %v2072 = vadd.f32 %v1952, %v2071
        %v2073 = vpop.f32.mrf.mxu0
        %v2074 = vadd.f32 %v1952, %v2073
        %2075 = vdwg.mxu0
        %v2076 = vmax.f32 %v2005, 0.0
        %v2077 = vmax.f32 %v2007, 0.0
        %v2078 = vmax.f32 %v2058, 0.0
        %v2079 = vmax.f32 %v2060, 0.0
        %v2080 = vmax.f32 %v2009, 0.0
        %v2081 = vmax.f32 %v2011, 0.0
        %v2082 = vmax.f32 %v2062, 0.0
        %v2083 = vmax.f32 %v2064, 0.0
        %v2084 = vmax.f32 %v2015, 0.0
        %v2085 = vmax.f32 %v2017, 0.0
        %v2086 = vmax.f32 %v2068, 0.0
        %v2087 = vmax.f32 %v2070, 0.0
        %v2088 = vmax.f32 %v2019, 0.0
        %v2089 = vmax.f32 %v2021, 0.0
        %v2090 = vmax.f32 %v2072, 0.0
        %v2091 = vmax.f32 %v2074, 0.0
        %s2092 = scalar_lea.vmem %s4, 48
        %v2093 = vld [vmem:[%s2092] sm:$0xf]
        %v2094 = vld [vmem:[%s2092 + $0x4] sm:$0xf]
        %v2095 = vld [vmem:[%s2092 + $0x8] sm:$0xf]
        %v2096 = vld [vmem:[%s2092 + $0xc] sm:$0xf]
        %v2097 = vpack.c.bf16 %v2080, %v2076
        %v2098 = vpack.c.bf16 %v2081, %v2077
        %v2099 = vpack.c.bf16 %v2082, %v2078
        %v2100 = vpack.c.bf16 %v2083, %v2079
        %v2101 = vpack.c.bf16 %v2088, %v2084
        %v2102 = vpack.c.bf16 %v2089, %v2085
        %v2103 = vpack.c.bf16 %v2090, %v2086
        %v2104 = vpack.c.bf16 %v2091, %v2087
        %s2105 = scalar_lea.vmem %s6, 224
        %v2106 = vld [vmem:[%s2105] sm:$0xff]
        %v2107 = vld [vmem:[%s2105 + $0x8] sm:$0xff]
        %v2108 = vld [vmem:[%s2105 + $0x10] sm:$0xff]
        %v2109 = vld [vmem:[%s2105 + $0x18] sm:$0xff]
        %2111 = vset.pattern.permute.xlu0 0
        %2112 = vperm.xlu0 %2111, %v2106
        %v2113 = vpop.permute.xlu0 %2112
        %2116 = vset.pattern.permute.xlu0 0
        %2117 = vperm.xlu0 %2116, %v2107
        %v2118 = vpop.permute.xlu0 %2117
        %2121 = vset.pattern.permute.xlu0 0
        %2122 = vperm.xlu0 %2121, %v2108
        %v2123 = vpop.permute.xlu0 %2122
        %2126 = vset.pattern.permute.xlu0 0
        %2127 = vperm.xlu0 %2126, %v2109
        %v2128 = vpop.permute.xlu0 %2127
        %v2134 = vunpack.c.l.b16 %v2093
        %v2135 = vunpack.c.l.b16 %v2094
        %v2136 = vunpack.c.l.b16 %v2095
        %v2137 = vunpack.c.l.b16 %v2096
        %v2138 = vpack.c.b16 %v2135, %v2134
        %v2139 = vpack.c.b16 %v2137, %v2136
        %v2141 = vsel %vm719, %v2138, 0
        %v2144 = vsel %vm719, %v2139, 0
        %2146 = vmatprep.subr.bf16.mxu0 0
        %2147 = vmatpush1.bf16.msra.mxu0 0
        %2148 = vmatprep.subr.bf16.mxu0 0
        %2149 = vmatpush1.bf16.msra.mxu0 0
        %2150 = vmatprep.subr.bf16.mxu0 0
        %2151 = vmatpush1.bf16.msra.mxu0 0
        %2152 = vmatprep.subr.bf16.mxu0 0
        %2153 = vmatpush1.bf16.msra.mxu0 0
        %2154 = vmatprep.subr.bf16.mxu0 0
        %2155 = vmatpush1.bf16.msra.mxu0 0
        %2156 = vmatprep.subr.bf16.mxu0 0
        %2157 = vmatpush1.bf16.msra.mxu0 0
        %2158 = vmatprep.subr.bf16.mxu0 %v2102
        %2159 = vmatpush1.bf16.msra.mxu0 %v2101
        %2160 = vmatprep.subr.bf16.mxu0 %v2098
        %2161 = vmatpush1.bf16.msra.mxu0 %v2097
        %2162 = vmatprep.subr.bf16.mxu0 0
        %2163 = vmatpush2.bf16.msra.mxu0 0
        %2164 = vmatprep.subr.bf16.mxu0 0
        %2165 = vmatpush2.bf16.msra.mxu0 0
        %2166 = vmatprep.subr.bf16.mxu0 0
        %2167 = vmatpush2.bf16.msra.mxu0 0
        %2168 = vmatprep.subr.bf16.mxu0 0
        %2169 = vmatpush2.bf16.msra.mxu0 0
        %2170 = vmatprep.subr.bf16.mxu0 0
        %2171 = vmatpush2.bf16.msra.mxu0 0
        %2172 = vmatprep.subr.bf16.mxu0 0
        %2173 = vmatpush2.bf16.msra.mxu0 0
        %2174 = vmatprep.subr.bf16.mxu0 0
        %2175 = vmatpush2.bf16.msra.mxu0 0
        %2176 = vmatprep.subr.bf16.mxu0 0
        %2177 = vmatpush2.bf16.msra.mxu0 0
        %2178 = vmatprep.mubr.bf16.mxu0 0
        %2179 = vmatmul.mubr.bf16.gmra.mxu0 %v2141
        %v2180 = vpop.f32.mrf.mxu0
        %v2181 = vadd.f32 %v2113, %v2180
        %v2182 = vpop.f32.mrf.mxu0
        %v2183 = vadd.f32 %v2113, %v2182
        %v2184 = vpop.f32.mrf.mxu0
        %v2185 = vadd.f32 %v2118, %v2184
        %v2186 = vpop.f32.mrf.mxu0
        %v2187 = vadd.f32 %v2118, %v2186
        %2188 = vmatprep.mubr.bf16.mxu0 0
        %2189 = vmatmul.mubr.bf16.gmra.mxu0 %v2144
        %v2190 = vpop.f32.mrf.mxu0
        %v2191 = vadd.f32 %v2123, %v2190
        %v2192 = vpop.f32.mrf.mxu0
        %v2193 = vadd.f32 %v2123, %v2192
        %v2194 = vpop.f32.mrf.mxu0
        %v2195 = vadd.f32 %v2128, %v2194
        %v2196 = vpop.f32.mrf.mxu0
        %v2197 = vadd.f32 %v2128, %v2196
        %2198 = vdwg.mxu0
        %2199 = vmatprep.subr.bf16.mxu0 0
        %2200 = vmatpush1.bf16.msra.mxu0 0
        %2201 = vmatprep.subr.bf16.mxu0 0
        %2202 = vmatpush1.bf16.msra.mxu0 0
        %2203 = vmatprep.subr.bf16.mxu0 0
        %2204 = vmatpush1.bf16.msra.mxu0 0
        %2205 = vmatprep.subr.bf16.mxu0 0
        %2206 = vmatpush1.bf16.msra.mxu0 0
        %2207 = vmatprep.subr.bf16.mxu0 0
        %2208 = vmatpush1.bf16.msra.mxu0 0
        %2209 = vmatprep.subr.bf16.mxu0 0
        %2210 = vmatpush1.bf16.msra.mxu0 0
        %2211 = vmatprep.subr.bf16.mxu0 %v2104
        %2212 = vmatpush1.bf16.msra.mxu0 %v2103
        %2213 = vmatprep.subr.bf16.mxu0 %v2100
        %2214 = vmatpush1.bf16.msra.mxu0 %v2099
        %2215 = vmatprep.subr.bf16.mxu0 0
        %2216 = vmatpush2.bf16.msra.mxu0 0
        %2217 = vmatprep.subr.bf16.mxu0 0
        %2218 = vmatpush2.bf16.msra.mxu0 0
        %2219 = vmatprep.subr.bf16.mxu0 0
        %2220 = vmatpush2.bf16.msra.mxu0 0
        %2221 = vmatprep.subr.bf16.mxu0 0
        %2222 = vmatpush2.bf16.msra.mxu0 0
        %2223 = vmatprep.subr.bf16.mxu0 0
        %2224 = vmatpush2.bf16.msra.mxu0 0
        %2225 = vmatprep.subr.bf16.mxu0 0
        %2226 = vmatpush2.bf16.msra.mxu0 0
        %2227 = vmatprep.subr.bf16.mxu0 0
        %2228 = vmatpush2.bf16.msra.mxu0 0
        %2229 = vmatprep.subr.bf16.mxu0 0
        %2230 = vmatpush2.bf16.msra.mxu0 0
        %2231 = vmatprep.mubr.bf16.mxu0 0
        %2232 = vmatmul.mubr.bf16.gmra.mxu0 %v2141
        %v2233 = vpop.f32.mrf.mxu0
        %v2234 = vadd.f32 %v2113, %v2233
        %v2235 = vpop.f32.mrf.mxu0
        %v2236 = vadd.f32 %v2113, %v2235
        %v2237 = vpop.f32.mrf.mxu0
        %v2238 = vadd.f32 %v2118, %v2237
        %v2239 = vpop.f32.mrf.mxu0
        %v2240 = vadd.f32 %v2118, %v2239
        %2241 = vmatprep.mubr.bf16.mxu0 0
        %2242 = vmatmul.mubr.bf16.gmra.mxu0 %v2144
        %v2243 = vpop.f32.mrf.mxu0
        %v2244 = vadd.f32 %v2123, %v2243
        %v2245 = vpop.f32.mrf.mxu0
        %v2246 = vadd.f32 %v2123, %v2245
        %v2247 = vpop.f32.mrf.mxu0
        %v2248 = vadd.f32 %v2128, %v2247
        %v2249 = vpop.f32.mrf.mxu0
        %v2250 = vadd.f32 %v2128, %v2249
        %2251 = vdwg.mxu0
        %v2252 = vmax.f32 %v2181, 0.0
        %v2253 = vmax.f32 %v2183, 0.0
        %v2254 = vmax.f32 %v2234, 0.0
        %v2255 = vmax.f32 %v2236, 0.0
        %v2256 = vmax.f32 %v2185, 0.0
        %v2257 = vmax.f32 %v2187, 0.0
        %v2258 = vmax.f32 %v2238, 0.0
        %v2259 = vmax.f32 %v2240, 0.0
        %v2260 = vmax.f32 %v2191, 0.0
        %v2261 = vmax.f32 %v2193, 0.0
        %v2262 = vmax.f32 %v2244, 0.0
        %v2263 = vmax.f32 %v2246, 0.0
        %v2264 = vmax.f32 %v2195, 0.0
        %v2265 = vmax.f32 %v2197, 0.0
        %v2266 = vmax.f32 %v2248, 0.0
        %v2267 = vmax.f32 %v2250, 0.0
        %s2268 = scalar_lea.vmem %s5, 24
        %v2269 = vld [vmem:[%s2268] sm:$0xf]
        %v2270 = vld [vmem:[%s2268 + $0x4] sm:$0xf]
        %v2271 = vpack.c.bf16 %v2256, %v2252
        %v2272 = vpack.c.bf16 %v2257, %v2253
        %v2273 = vpack.c.bf16 %v2258, %v2254
        %v2274 = vpack.c.bf16 %v2259, %v2255
        %v2275 = vpack.c.bf16 %v2264, %v2260
        %v2276 = vpack.c.bf16 %v2265, %v2261
        %v2277 = vpack.c.bf16 %v2266, %v2262
        %v2278 = vpack.c.bf16 %v2267, %v2263
        %s2279 = scalar_lea.vmem %s7, 48
        %v2280 = vld [vmem:[%s2279] sm:$0xff]
        %v2281 = vld [vmem:[%s2279 + $0x8] sm:$0xff]
        %2283 = vset.pattern.permute.xlu0 0
        %2284 = vperm.xlu0 %2283, %v2280
        %v2285 = vpop.permute.xlu0 %2284
        %2288 = vset.pattern.permute.xlu0 0
        %2289 = vperm.xlu0 %2288, %v2281
        %v2290 = vpop.permute.xlu0 %2289
        %v2294 = vunpack.c.l.b16 %v2269
        %v2295 = vunpack.c.l.b16 %v2270
        %v2296 = vpack.c.b16 %v2295, %v2294
        %v2298 = vsel %vm719, %v2296, 0
        %2300 = vmatprep.subr.bf16.mxu0 0
        %2301 = vmatpush1.bf16.msra.mxu0 0
        %2302 = vmatprep.subr.bf16.mxu0 0
        %2303 = vmatpush1.bf16.msra.mxu0 0
        %2304 = vmatprep.subr.bf16.mxu0 0
        %2305 = vmatpush1.bf16.msra.mxu0 0
        %2306 = vmatprep.subr.bf16.mxu0 0
        %2307 = vmatpush1.bf16.msra.mxu0 0
        %2308 = vmatprep.subr.bf16.mxu0 0
        %2309 = vmatpush1.bf16.msra.mxu0 0
        %2310 = vmatprep.subr.bf16.mxu0 0
        %2311 = vmatpush1.bf16.msra.mxu0 0
        %2312 = vmatprep.subr.bf16.mxu0 %v2276
        %2313 = vmatpush1.bf16.msra.mxu0 %v2275
        %2314 = vmatprep.subr.bf16.mxu0 %v2272
        %2315 = vmatpush1.bf16.msra.mxu0 %v2271
        %2316 = vmatprep.subr.bf16.mxu0 0
        %2317 = vmatpush2.bf16.msra.mxu0 0
        %2318 = vmatprep.subr.bf16.mxu0 0
        %2319 = vmatpush2.bf16.msra.mxu0 0
        %2320 = vmatprep.subr.bf16.mxu0 0
        %2321 = vmatpush2.bf16.msra.mxu0 0
        %2322 = vmatprep.subr.bf16.mxu0 0
        %2323 = vmatpush2.bf16.msra.mxu0 0
        %2324 = vmatprep.subr.bf16.mxu0 0
        %2325 = vmatpush2.bf16.msra.mxu0 0
        %2326 = vmatprep.subr.bf16.mxu0 0
        %2327 = vmatpush2.bf16.msra.mxu0 0
        %2328 = vmatprep.subr.bf16.mxu0 0
        %2329 = vmatpush2.bf16.msra.mxu0 0
        %2330 = vmatprep.subr.bf16.mxu0 0
        %2331 = vmatpush2.bf16.msra.mxu0 0
        %2332 = vmatprep.mubr.bf16.mxu0 0
        %2333 = vmatmul.mubr.bf16.gmra.mxu0 %v2298
        %v2334 = vpop.f32.mrf.mxu0
        %v2335 = vadd.f32 %v2285, %v2334
        %v2336 = vpop.f32.mrf.mxu0
        %v2337 = vadd.f32 %v2285, %v2336
        %v2338 = vpop.f32.mrf.mxu0
        %v2339 = vadd.f32 %v2290, %v2338
        %v2340 = vpop.f32.mrf.mxu0
        %v2341 = vadd.f32 %v2290, %v2340
        %2342 = vdwg.mxu0
        %2343 = vmatprep.subr.bf16.mxu0 0
        %2344 = vmatpush1.bf16.msra.mxu0 0
        %2345 = vmatprep.subr.bf16.mxu0 0
        %2346 = vmatpush1.bf16.msra.mxu0 0
        %2347 = vmatprep.subr.bf16.mxu0 0
        %2348 = vmatpush1.bf16.msra.mxu0 0
        %2349 = vmatprep.subr.bf16.mxu0 0
        %2350 = vmatpush1.bf16.msra.mxu0 0
        %2351 = vmatprep.subr.bf16.mxu0 0
        %2352 = vmatpush1.bf16.msra.mxu0 0
        %2353 = vmatprep.subr.bf16.mxu0 0
        %2354 = vmatpush1.bf16.msra.mxu0 0
        %2355 = vmatprep.subr.bf16.mxu0 %v2278
        %2356 = vmatpush1.bf16.msra.mxu0 %v2277
        %2357 = vmatprep.subr.bf16.mxu0 %v2274
        %2358 = vmatpush1.bf16.msra.mxu0 %v2273
        %2359 = vmatprep.subr.bf16.mxu0 0
        %2360 = vmatpush2.bf16.msra.mxu0 0
        %2361 = vmatprep.subr.bf16.mxu0 0
        %2362 = vmatpush2.bf16.msra.mxu0 0
        %2363 = vmatprep.subr.bf16.mxu0 0
        %2364 = vmatpush2.bf16.msra.mxu0 0
        %2365 = vmatprep.subr.bf16.mxu0 0
        %2366 = vmatpush2.bf16.msra.mxu0 0
        %2367 = vmatprep.subr.bf16.mxu0 0
        %2368 = vmatpush2.bf16.msra.mxu0 0
        %2369 = vmatprep.subr.bf16.mxu0 0
        %2370 = vmatpush2.bf16.msra.mxu0 0
        %2371 = vmatprep.subr.bf16.mxu0 0
        %2372 = vmatpush2.bf16.msra.mxu0 0
        %2373 = vmatprep.subr.bf16.mxu0 0
        %2374 = vmatpush2.bf16.msra.mxu0 0
        %2375 = vmatprep.mubr.bf16.mxu0 0
        %2376 = vmatmul.mubr.bf16.gmra.mxu0 %v2298
        %v2377 = vpop.f32.mrf.mxu0
        %v2378 = vadd.f32 %v2285, %v2377
        %v2379 = vpop.f32.mrf.mxu0
        %v2380 = vadd.f32 %v2285, %v2379
        %v2381 = vpop.f32.mrf.mxu0
        %v2382 = vadd.f32 %v2290, %v2381
        %v2383 = vpop.f32.mrf.mxu0
        %v2384 = vadd.f32 %v2290, %v2383
        %2385 = vdwg.mxu0
        %v2386 = vadd.f32 %v1912, %v2335
        %v2387 = vadd.f32 %v1913, %v2337
        %v2388 = vadd.f32 %v1914, %v2378
        %v2389 = vadd.f32 %v1915, %v2380
        %v2390 = vadd.f32 %v1916, %v2339
        %v2391 = vadd.f32 %v1917, %v2341
        %v2392 = vadd.f32 %v1918, %v2382
        %v2393 = vadd.f32 %v1919, %v2384
        %v2394 = vld [vmem:[%s2] sm:$0xff]
        %v2395 = vld [vmem:[%s2 + $0x8] sm:$0xff]
        %2397 = vset.pattern.permute.xlu0 0
        %2398 = vperm.xlu0 %2397, %v2394
        %v2399 = vpop.permute.xlu0 %2398
        %2402 = vset.pattern.permute.xlu0 0
        %2403 = vperm.xlu0 %2402, %v2395
        %v2404 = vpop.permute.xlu0 %2403
        %v2406 = vmul.f32 %v2386, %v2399
        %v2407 = vmul.f32 %v2387, %v2399
        %v2408 = vmul.f32 %v2388, %v2399
        %v2409 = vmul.f32 %v2389, %v2399
        %v2410 = vmul.f32 %v2390, %v2404
        %v2411 = vmul.f32 %v2391, %v2404
        %v2412 = vmul.f32 %v2392, %v2404
        %v2413 = vmul.f32 %v2393, %v2404
        %v2414 = vmul.f32 %v2406, %v2406
        %v2415 = vmul.f32 %v2407, %v2407
        %v2416 = vmul.f32 %v2408, %v2408
        %v2417 = vmul.f32 %v2409, %v2409
        %v2418 = vmul.f32 %v2410, %v2410
        %v2419 = vmul.f32 %v2411, %v2411
        %v2420 = vmul.f32 %v2412, %v2412
        %v2421 = vmul.f32 %v2413, %v2413
        %v2422 = vadd.f32 %v2414, %v2418
        %v2423 = vrot.slane %v2422, 4
        %v2424 = vadd.f32 %v2422, %v2423
        %v2425 = vrot.slane %v2424, 2
        %v2426 = vadd.f32 %v2424, %v2425
        %v2427 = vrot.slane %v2426, 1
        %v2428 = vadd.f32 %v2426, %v2427
        %v2429 = vadd.f32 %v2415, %v2419
        %v2430 = vrot.slane %v2429, 4
        %v2431 = vadd.f32 %v2429, %v2430
        %v2432 = vrot.slane %v2431, 2
        %v2433 = vadd.f32 %v2431, %v2432
        %v2434 = vrot.slane %v2433, 1
        %v2435 = vadd.f32 %v2433, %v2434
        %v2436 = vadd.f32 %v2416, %v2420
        %v2437 = vrot.slane %v2436, 4
        %v2438 = vadd.f32 %v2436, %v2437
        %v2439 = vrot.slane %v2438, 2
        %v2440 = vadd.f32 %v2438, %v2439
        %v2441 = vrot.slane %v2440, 1
        %v2442 = vadd.f32 %v2440, %v2441
        %v2443 = vadd.f32 %v2417, %v2421
        %v2444 = vrot.slane %v2443, 4
        %v2445 = vadd.f32 %v2443, %v2444
        %v2446 = vrot.slane %v2445, 2
        %v2447 = vadd.f32 %v2445, %v2446
        %v2448 = vrot.slane %v2447, 1
        %v2449 = vadd.f32 %v2447, %v2448
        %v2450 = vmul.f32 %v2428, -0.5
        %v2451 = vmul.f32 %v2435, -0.5
        %v2452 = vmul.f32 %v2442, -0.5
        %v2453 = vmul.f32 %v2449, -0.5
        %s2454 = sld [smem:[#allocation2]]
        %v2455 = vstv %s2454
        %v2456 = vadd.f32 %v2450, %v2455
        %v2457 = vadd.f32 %v2451, %v2455
        %v2458 = vadd.f32 %v2452, %v2455
        %v2459 = vadd.f32 %v2453, %v2455
        %v2464 = vcombine.low %v2456, %v2457
        %v2465 = vcombine.low %v2458, %v2459
        %v2467 = vunpack.c.l.s4 1966171168
        %v2468 = vunpack.c.0.s8 %v2467
        %v2469 = vlaneseq
        %v2470 = vshrl.u32 %v2469, 7
        %v2471 = vsub.s32 %v2468, %v2470
        %v2472 = vrot.slane %v2464, %v2471
        %v2474 = vunpack.c.l.s4 1966171168
        %v2475 = vunpack.c.0.s8 %v2474
        %v2476 = vlaneseq
        %v2477 = vshrl.u32 %v2476, 7
        %v2478 = vsub.s32 %v2475, %v2477
        %v2479 = vrot.slane %v2465, %v2478
        %v2480 = vcombine.low %v2472, %v2479
        %v2482 = vunpack.c.l.s4 1966171168
        %v2483 = vunpack.c.0.s8 %v2482
        %v2484 = vlaneseq
        %v2485 = vshrl.u32 %v2484, 7
        %v2486 = vsub.s32 %v2483, %v2485
        %v2487 = vrot.slane %v2480, %v2486
        %v2489 = vlaneseq
        %vm2490 = vcmp.ge.s32.totalorder %v2489, 0
        %vm2491 = vcmp.lt.s32.totalorder %v2489, 512
        %vm2492 = vmand %vm2490, %vm2491
        %2493 = vst.msk [vmem:[%s300] sm:$0xf] %vm2492, %v2487
        %s2494 = sand.u32 %s204, 1
        %s2495 = scalar_lea.sflag [#allocation4], %s2494
        %s2496 = sand.u32 %s204, 1
        %s2497 = smul.addr %s2496, 4
        %s2498 = scalar_lea.vmem [#allocation3], %s2497
        // Predicated region
        $region53: #{tpu_custom_call.1} parent=51 // pred_check
          %p2499 = pneg %p214
        $region54: #{tpu_custom_call.1} parent=51 // pred_check_branch
          %2501 = sbr.rel (%p2499) target = $region56
        $region55: #{tpu_custom_call.1} parent=51 // pred_region
          %s2502 = smul.u32 4, %s23
          %s2504 = ssub.s32 64, 64
          %2505 = vsyncadd %s2495, %s2504
          %s2506 = smul.addr %s2502, 16
          %s2507 = scalar_lea.hbm %s8, %s2506
          %s2509 = sshll.u32 %s2498, 4
          %s2510 = int_to_ptr.vmem [resolvable:$true] %s2509
          %2512 = dma.vmem_to_hbm [thread:$0]  %s2510, 64, %s2507, %s2495
        $region56: #{tpu_custom_call.1} parent=51 // pred_fallthru
          _
      $region52: #{tpu_custom_call.1} parent=5 // pred_fallthru
        _
      %p2513 = scmp.le.s32.totalorder 2, %s18
      // Predicated region
      $region57: #{tpu_custom_call.1} parent=5 // pred_check
        %p2514 = pneg %p2513
      $region58: #{tpu_custom_call.1} parent=5 // pred_check_branch
        %2516 = sbr.rel (%p2514) target = $region60
      $region59: #{tpu_custom_call.1} parent=5 // pred_region
        %s2517 = ssub.s32 %s18, 2
        // Predicated region
        $region61: #{tpu_custom_call.1} parent=59 // pred_check
          %p2518 = pneg %p220
        $region62: #{tpu_custom_call.1} parent=59 // pred_check_branch
          %2520 = sbr.rel (%p2518) target = $region64
        $region63: #{tpu_custom_call.1} parent=59 // pred_region
          %s2521 = sand.u32 %s205, 1
          %s2522 = scalar_lea.sflag [#allocation4], %s2521
          %s2523 = sand.u32 %s205, 1
          %s2524 = smul.addr %s2523, 4
          %s2525 = scalar_lea.vmem [#allocation3], %s2524
          %2526 = dma.done %s2522, 64
        $region64: #{tpu_custom_call.1} parent=59 // pred_fallthru
          _
      $region60: #{tpu_custom_call.1} parent=5 // pred_fallthru
        _
    $region6: #{tpu_custom_call.1} parent=1 // loop_footer
      %s22 = sadd.s32 1, %s18
    $region7: #{tpu_custom_call.1} parent=1 // loop_footer_branch
      %17 = sbr.rel target = $region3
    $region8: #{tpu_custom_call.1} parent=1 // loop_exit
      _
    %2527 = vsyncpa [#allocation4], 1
    %s2528 = scalar_lea.sflag [#allocation4], 1
    %2529 = vsyncpa %s2528, 1

</llo_original>
